<compile_context>
chip_gen: v7x
topology: tpu7x:2x2x1
jax: 0.10.0
libtpu: 0.0.40
codegen_flags: <defaults>
</compile_context>

<pallas_src>
import functools

import jax
import jax.numpy as jnp
from jax.experimental import pallas as pl
from jax.experimental.pallas import tpu as pltpu

# ----------------------- synthetic "CLIPVisionConfig" -----------------------
IMAGE_SIZE = 16
PATCH_SIZE = 8
CHANNELS = 3
HIDDEN = 32
HEADS = 4
HEAD_DIM = HIDDEN // HEADS
INTERMEDIATE = 64
NUM_LAYERS = 3
SELECT_LAYER = -2          # args['mm_vision_select_layer']
SELECT_FEATURE = "patch"   # args['mm_vision_select_feature']
EPS = 1e-5

NUM_PATCHES = (IMAGE_SIZE // PATCH_SIZE) ** 2   # 4
SEQ = NUM_PATCHES + 1                           # 5  (CLS + patches)
PATCH_DIM = CHANNELS * PATCH_SIZE * PATCH_SIZE  # 192


# --------------------------------- kernel -----------------------------------
def _layernorm(x, g, b):
    mu = jnp.mean(x, axis=-1, keepdims=True)
    var = jnp.mean((x - mu) ** 2, axis=-1, keepdims=True)
    return (x - mu) * jax.lax.rsqrt(var + EPS) * g + b


def tower_kernel(patches_ref, wpat_ref, poscls_ref, preg_ref, preb_ref,
                 ln1g_ref, ln1b_ref, wqkv_ref, bqkv_ref, wo_ref, bo_ref,
                 ln2g_ref, ln2b_ref, w1_ref, b1_ref, w2_ref, b2_ref,
                 out_ref, *, n_layers, drop_cls):
    """Full CLIP vision tower for one image: embed + pre-LN + n_layers encoder layers."""
    # ---- embeddings + pre-layernorm  (== hidden_states[0]) ----
    # patches row 0 is zero-padded host-side, and CLS is folded into poscls row 0,
    # so a single (SEQ, PATCH_DIM) x (PATCH_DIM, D) matmul + add builds [CLS; patch_embeds]+pos
    # without any in-kernel concatenate.
    patches = patches_ref[0]                                          # (SEQ, PATCH_DIM) f32
    pe = jnp.dot(patches.astype(jnp.bfloat16), wpat_ref[...],
                 preferred_element_type=jnp.float32)                  # (SEQ, D)
    x = pe + poscls_ref[...]
    x = _layernorm(x, preg_ref[...], preb_ref[...])

    def layer_body(l, x):
        # -------- self attention --------
        residual = x
        h = _layernorm(x, ln1g_ref[l], ln1b_ref[l])
        # fused QKV projection (q-scale already folded into wqkv/bqkv host-side)
        qkv = jnp.dot(h.astype(jnp.bfloat16), wqkv_ref[l],
                      preferred_element_type=jnp.float32) + bqkv_ref[l]   # (S, 3D)
        q = qkv[:, 0 * HIDDEN:1 * HIDDEN]
        k = qkv[:, 1 * HIDDEN:2 * HIDDEN]
        v = qkv[:, 2 * HIDDEN:3 * HIDDEN]
        # head-major views (HEADS, S, HEAD_DIM) built by stacking static lane slices
        # (avoids >2-D transposes), then batched-over-heads attention einsums.
        q3 = jnp.stack([q[:, hh * HEAD_DIM:(hh + 1) * HEAD_DIM] for hh in range(HEADS)], 0)
        k3 = jnp.stack([k[:, hh * HEAD_DIM:(hh + 1) * HEAD_DIM] for hh in range(HEADS)], 0)
        v3 = jnp.stack([v[:, hh * HEAD_DIM:(hh + 1) * HEAD_DIM] for hh in range(HEADS)], 0)
        s = jnp.einsum('hqd,hkd->hqk', q3, k3,
                       preferred_element_type=jnp.float32)                # (H, S, S)
        s = s - jnp.max(s, axis=-1, keepdims=True)
        p = jnp.exp(s)
        p = p * pl.reciprocal(jnp.sum(p, axis=-1, keepdims=True), approx=True)
        o3 = jnp.einsum('hqk,hkd->hqd', p, v3,
                        preferred_element_type=jnp.float32)               # (H, S, hd)
        attn = jnp.concatenate([o3[hh] for hh in range(HEADS)], axis=-1)  # (S, D)
        attn = jnp.dot(attn.astype(jnp.bfloat16), wo_ref[l],
                       preferred_element_type=jnp.float32) + bo_ref[l]
        x = residual + attn

        # -------- MLP (quick_gelu) --------
        residual = x
        h = _layernorm(x, ln2g_ref[l], ln2b_ref[l])
        h = jnp.dot(h.astype(jnp.bfloat16), w1_ref[l],
                    preferred_element_type=jnp.float32) + b1_ref[l]
        h = h * jax.nn.sigmoid(1.702 * h)
        h = jnp.dot(h.astype(jnp.bfloat16), w2_ref[l],
                    preferred_element_type=jnp.float32) + b2_ref[l]
        return residual + h

    x = jax.lax.fori_loop(0, n_layers, layer_body, x)

    # only the selected features ever hit HBM
    if drop_cls:
        out_ref[0] = x[1:, :]            # drop CLS token  -> (P, D)
    else:
        out_ref[0] = x                   # cls_patch       -> (S, D)


# ------------------------------ pallas wrapper -------------------------------
def _full_spec(shape):
    ndim = len(shape)
    return pl.BlockSpec(shape, lambda b: (0,) * ndim)


def pallas_tower(patches, pk):
    B = patches.shape[0]
    drop_cls = SELECT_FEATURE == "patch"
    out_seq = NUM_PATCHES if drop_cls else SEQ
    weights = (pk["w_patch"], pk["pos_cls"], pk["pre_g"], pk["pre_b"],
               pk["ln1_g"], pk["ln1_b"], pk["wqkv"], pk["bqkv"],
               pk["wo"], pk["bo"], pk["ln2_g"], pk["ln2_b"],
               pk["w1"], pk["b1"], pk["w2"], pk["b2"])
    in_specs = [pl.BlockSpec((1, SEQ, PATCH_DIM), lambda b: (b, 0, 0))]
    in_specs += [_full_spec(w.shape) for w in weights]     # constant -> fetched once

    kernel = functools.partial(tower_kernel, n_layers=pk["n_run"], drop_cls=drop_cls)
    return pl.pallas_call(
        kernel,
        out_shape=jax.ShapeDtypeStruct((B, out_seq, HIDDEN), jnp.float32),
        grid=(B,),
        in_specs=in_specs,
        out_specs=pl.BlockSpec((1, out_seq, HIDDEN), lambda b: (b, 0, 0)),
        compiler_params=pltpu.CompilerParams(dimension_semantics=("parallel",)),
    )(patches, *weights)


# ----------------------------- parameter setup -------------------------------
def init_params(key):
    def nrm(k, shape, scale=0.02):
        return (scale * jax.random.normal(k, shape)).astype(jnp.float32)

    keys = jax.random.split(key, 4 + NUM_LAYERS)
    params = {
        # conv weight [D, C, ps, ps] stored flattened & transposed -> [C*ps*ps, D]
        "w_patch": nrm(keys[0], (PATCH_DIM, HIDDEN)),
        "cls": nrm(keys[1], (1, HIDDEN)),
        "pos": nrm(keys[2], (SEQ, HIDDEN)),
        "pre_ln_g": jnp.ones((1, HIDDEN), jnp.float32),
        "pre_ln_b": jnp.zeros((1, HIDDEN), jnp.float32),
        "layers": [],
    }
    for li in range(NUM_LAYERS):
        lk = jax.random.split(keys[4 + li], 6)
        params["layers"].append({
            "ln1_g": jnp.ones((1, HIDDEN), jnp.float32),
            "ln1_b": jnp.zeros((1, HIDDEN), jnp.float32),
            "wq": nrm(lk[0], (HIDDEN, HIDDEN)), "bq": jnp.zeros((1, HIDDEN), jnp.float32),
            "wk": nrm(lk[1], (HIDDEN, HIDDEN)), "bk": jnp.zeros((1, HIDDEN), jnp.float32),
            "wv": nrm(lk[2], (HIDDEN, HIDDEN)), "bv": jnp.zeros((1, HIDDEN), jnp.float32),
            "wo": nrm(lk[3], (HIDDEN, HIDDEN)), "bo": jnp.zeros((1, HIDDEN), jnp.float32),
            "ln2_g": jnp.ones((1, HIDDEN), jnp.float32),
            "ln2_b": jnp.zeros((1, HIDDEN), jnp.float32),
            "w1": nrm(lk[4], (HIDDEN, INTERMEDIATE)),
            "b1": jnp.zeros((1, INTERMEDIATE), jnp.float32),
            "w2": nrm(lk[5], (INTERMEDIATE, HIDDEN)),
            "b2": jnp.zeros((1, HIDDEN), jnp.float32),
        })
    return params


def pack_params(params):
    """Host-side packing: stack per-layer weights, fuse QKV, fold q-scale & CLS, cast to bf16."""
    # hidden_states has NUM_LAYERS + 1 entries; select_layer indexes that tuple.
    sel = SELECT_LAYER % (NUM_LAYERS + 1)        # -2 -> NUM_LAYERS - 1 -> run layers 0..sel-1
    layers = params["layers"][:sel]
    scale = HEAD_DIM ** -0.5

    def stk(name):
        return jnp.stack([L[name] for L in layers], axis=0)

    wqkv = jnp.stack([jnp.concatenate([L["wq"] * scale, L["wk"], L["wv"]], axis=1)
                      for L in layers], axis=0).astype(jnp.bfloat16)          # (L, D, 3D)
    bqkv = jnp.stack([jnp.concatenate([L["bq"] * scale, L["bk"], L["bv"]], axis=1)
                      for L in layers], axis=0)                               # (L, 1, 3D)

    return {
        "n_run": sel,
        "w_patch": params["w_patch"].astype(jnp.bfloat16),
        # CLS embedding folded into position-embedding row 0 (patch row 0 is zero-padded)
        "pos_cls": params["pos"].at[0].add(params["cls"][0]),
        "pre_g": params["pre_ln_g"], "pre_b": params["pre_ln_b"],
        "ln1_g": stk("ln1_g"), "ln1_b": stk("ln1_b"),
        "wqkv": wqkv, "bqkv": bqkv,
        "wo": stk("wo").astype(jnp.bfloat16), "bo": stk("bo"),
        "ln2_g": stk("ln2_g"), "ln2_b": stk("ln2_b"),
        "w1": stk("w1").astype(jnp.bfloat16), "b1": stk("b1"),
        "w2": stk("w2").astype(jnp.bfloat16), "b2": stk("b2"),
    }


# ------------------------------ forward (tower) -------------------------------
def extract_patches_padded(images):
    """NCHW -> [B, SEQ, C*ps*ps]: row 0 is a zero 'CLS' patch, rows 1: are image patches
    (row-major over the patch grid, per-patch features ordered (c, u, v) to match conv2d)."""
    B, C, H, W = images.shape
    Hp, Wp = H // PATCH_SIZE, W // PATCH_SIZE
    x = images.reshape(B, C, Hp, PATCH_SIZE, Wp, PATCH_SIZE)
    x = x.transpose(0, 2, 4, 1, 3, 5)              # [B, Hp, Wp, C, ps, ps]
    x = x.reshape(B, Hp * Wp, C * PATCH_SIZE * PATCH_SIZE)
    zeros = jnp.zeros((B, 1, x.shape[-1]), x.dtype)
    return jnp.concatenate([zeros, x], axis=1)     # [B, SEQ, PATCH_DIM]


def clip_vision_tower_forward(images, packed):
    """Equivalent of CLIPVisionTower.forward for a batched tensor input."""
    if SELECT_FEATURE not in ("patch", "cls_patch"):
        raise ValueError(f"Unexpected select feature: {SELECT_FEATURE}")
    in_dtype = images.dtype
    images = images.astype(jnp.float32)
    patches = extract_patches_padded(images)
    feats = pallas_tower(patches, packed)          # (B, P, D) or (B, S, D)
    return feats.astype(in_dtype)


# ----------------------------------- main -------------------------------------
if __name__ == "__main__":
    key = jax.random.PRNGKey(0)
    pkey, ikey = jax.random.split(key)
    params = init_params(pkey)
    packed = pack_params(params)

    # images: [B, C, H, W]  (PyTorch NCHW)
    images = jax.random.normal(ikey, (2, CHANNELS, IMAGE_SIZE, IMAGE_SIZE),
                               dtype=jnp.float32)

    feats = clip_vision_tower_forward(images, packed)
    feats = jax.block_until_ready(feats)
    assert feats.shape == (2, NUM_PATCHES, HIDDEN), feats.shape
    print("KERNEL_OK")
</pallas_src>

<mosaic_0001>
module attributes {stable_mosaic.version = 11 : i64} {
  func.func @tower_kernel(%arg0: i32, %arg1: memref<1x5x192xf32, #tpu.memory_space<vmem>>, %arg2: memref<192x32xbf16, #tpu.memory_space<vmem>>, %arg3: memref<5x32xf32, #tpu.memory_space<vmem>>, %arg4: memref<1x32xf32, #tpu.memory_space<vmem>>, %arg5: memref<1x32xf32, #tpu.memory_space<vmem>>, %arg6: memref<2x1x32xf32, #tpu.memory_space<vmem>>, %arg7: memref<2x1x32xf32, #tpu.memory_space<vmem>>, %arg8: memref<2x32x96xbf16, #tpu.memory_space<vmem>>, %arg9: memref<2x1x96xf32, #tpu.memory_space<vmem>>, %arg10: memref<2x32x32xbf16, #tpu.memory_space<vmem>>, %arg11: memref<2x1x32xf32, #tpu.memory_space<vmem>>, %arg12: memref<2x1x32xf32, #tpu.memory_space<vmem>>, %arg13: memref<2x1x32xf32, #tpu.memory_space<vmem>>, %arg14: memref<2x32x64xbf16, #tpu.memory_space<vmem>>, %arg15: memref<2x1x64xf32, #tpu.memory_space<vmem>>, %arg16: memref<2x64x32xbf16, #tpu.memory_space<vmem>>, %arg17: memref<2x1x32xf32, #tpu.memory_space<vmem>>, %arg18: memref<1x4x32xf32, #tpu.memory_space<vmem>>) attributes {dimension_semantics = [#tpu.dimension_semantics<parallel>], iteration_bounds = array<i64: 2>, scalar_prefetch = 0 : i64, scratch_operands = 0 : i64, tpu.core_type = #tpu.core_type<tc>, window_params = [{transform_indices = @transform_0, window_bounds = array<i64: 1, 5, 192>}, {pipeline_mode = #tpu.pipeline_mode<synchronous>, transform_indices = @transform_1, window_bounds = array<i64: 192, 32>}, {pipeline_mode = #tpu.pipeline_mode<synchronous>, transform_indices = @transform_2, window_bounds = array<i64: 5, 32>}, {pipeline_mode = #tpu.pipeline_mode<synchronous>, transform_indices = @transform_3, window_bounds = array<i64: 1, 32>}, {pipeline_mode = #tpu.pipeline_mode<synchronous>, transform_indices = @transform_4, window_bounds = array<i64: 1, 32>}, {pipeline_mode = #tpu.pipeline_mode<synchronous>, transform_indices = @transform_5, window_bounds = array<i64: 2, 1, 32>}, {pipeline_mode = #tpu.pipeline_mode<synchronous>, transform_indices = @transform_6, window_bounds = array<i64: 2, 1, 32>}, {pipeline_mode = #tpu.pipeline_mode<synchronous>, transform_indices = @transform_7, window_bounds = array<i64: 2, 32, 96>}, {pipeline_mode = #tpu.pipeline_mode<synchronous>, transform_indices = @transform_8, window_bounds = array<i64: 2, 1, 96>}, {pipeline_mode = #tpu.pipeline_mode<synchronous>, transform_indices = @transform_9, window_bounds = array<i64: 2, 32, 32>}, {pipeline_mode = #tpu.pipeline_mode<synchronous>, transform_indices = @transform_10, window_bounds = array<i64: 2, 1, 32>}, {pipeline_mode = #tpu.pipeline_mode<synchronous>, transform_indices = @transform_11, window_bounds = array<i64: 2, 1, 32>}, {pipeline_mode = #tpu.pipeline_mode<synchronous>, transform_indices = @transform_12, window_bounds = array<i64: 2, 1, 32>}, {pipeline_mode = #tpu.pipeline_mode<synchronous>, transform_indices = @transform_13, window_bounds = array<i64: 2, 32, 64>}, {pipeline_mode = #tpu.pipeline_mode<synchronous>, transform_indices = @transform_14, window_bounds = array<i64: 2, 1, 64>}, {pipeline_mode = #tpu.pipeline_mode<synchronous>, transform_indices = @transform_15, window_bounds = array<i64: 2, 64, 32>}, {pipeline_mode = #tpu.pipeline_mode<synchronous>, transform_indices = @transform_16, window_bounds = array<i64: 2, 1, 32>}, {transform_indices = @transform_17, window_bounds = array<i64: 1, 4, 32>}]} {
    %c0 = arith.constant 0 : index
    %c0_0 = arith.constant 0 : index
    %c0_1 = arith.constant 0 : index
    %0 = vector.load %arg1[%c0, %c0_0, %c0_1] : memref<1x5x192xf32, #tpu.memory_space<vmem>>, vector<1x5x192xf32>
    %1 = vector.shape_cast %0 : vector<1x5x192xf32> to vector<5x192xf32>
    %2 = arith.truncf %1 : vector<5x192xf32> to vector<5x192xbf16>
    %c0_2 = arith.constant 0 : index
    %c0_3 = arith.constant 0 : index
    %3 = vector.load %arg2[%c0_2, %c0_3] : memref<192x32xbf16, #tpu.memory_space<vmem>>, vector<192x32xbf16>
    %cst = arith.constant dense<0.000000e+00> : vector<5x32xf32>
    %4 = tpu.matmul %2, %3, %cst {dimension_numbers = #tpu.dot_dimension_numbers<[1], [0], [0], [1], [0, 0, 1, 1], [], []>} : vector<5x192xbf16>, vector<192x32xbf16>, vector<5x32xf32> -> vector<5x32xf32>
    %c0_4 = arith.constant 0 : index
    %c0_5 = arith.constant 0 : index
    %5 = vector.load %arg3[%c0_4, %c0_5] : memref<5x32xf32, #tpu.memory_space<vmem>>, vector<5x32xf32>
    %6 = arith.addf %4, %5 : vector<5x32xf32>
    %c0_6 = arith.constant 0 : index
    %c0_7 = arith.constant 0 : index
    %7 = vector.load %arg4[%c0_6, %c0_7] : memref<1x32xf32, #tpu.memory_space<vmem>>, vector<1x32xf32>
    %c0_8 = arith.constant 0 : index
    %c0_9 = arith.constant 0 : index
    %8 = vector.load %arg5[%c0_8, %c0_9] : memref<1x32xf32, #tpu.memory_space<vmem>>, vector<1x32xf32>
    %cst_10 = arith.constant dense<0.000000e+00> : vector<5xf32>
    %9 = vector.multi_reduction <add>, %6, %cst_10 [1] : vector<5x32xf32> to vector<5xf32>
    %10 = vector.shape_cast %9 : vector<5xf32> to vector<5x1xf32>
    %cst_11 = arith.constant 3.200000e+01 : f32
    %11 = vector.broadcast %cst_11 : f32 to vector<5x1xf32>
    %12 = arith.divf %10, %11 : vector<5x1xf32>
    %13 = vector.broadcast %12 : vector<5x1xf32> to vector<5x32xf32>
    %14 = arith.subf %6, %13 : vector<5x32xf32>
    %15 = arith.mulf %14, %14 : vector<5x32xf32>
    %cst_12 = arith.constant dense<0.000000e+00> : vector<5xf32>
    %16 = vector.multi_reduction <add>, %15, %cst_12 [1] : vector<5x32xf32> to vector<5xf32>
    %17 = vector.shape_cast %16 : vector<5xf32> to vector<5x1xf32>
    %cst_13 = arith.constant 3.200000e+01 : f32
    %18 = vector.broadcast %cst_13 : f32 to vector<5x1xf32>
    %19 = arith.divf %17, %18 : vector<5x1xf32>
    %20 = vector.broadcast %12 : vector<5x1xf32> to vector<5x32xf32>
    %21 = arith.subf %6, %20 : vector<5x32xf32>
    %cst_14 = arith.constant 9.99999974E-6 : f32
    %22 = vector.broadcast %cst_14 : f32 to vector<5x1xf32>
    %23 = arith.addf %19, %22 : vector<5x1xf32>
    %24 = math.rsqrt %23 : vector<5x1xf32>
    %25 = vector.broadcast %24 : vector<5x1xf32> to vector<5x32xf32>
    %26 = arith.mulf %21, %25 : vector<5x32xf32>
    %27 = vector.broadcast %7 : vector<1x32xf32> to vector<5x32xf32>
    %28 = arith.mulf %26, %27 : vector<5x32xf32>
    %29 = vector.broadcast %8 : vector<1x32xf32> to vector<5x32xf32>
    %30 = arith.addf %28, %29 : vector<5x32xf32>
    %c0_i32 = arith.constant 0 : i32
    %c2_i32 = arith.constant 2 : i32
    %31 = arith.addi %c0_i32, %c2_i32 : i32
    %c1_i32 = arith.constant 1 : i32
    %32 = scf.for %arg19 = %c0_i32 to %31 step %c1_i32 iter_args(%arg20 = %30) -> (vector<5x32xf32>)  : i32 {
      %37 = arith.index_cast %arg19 : i32 to index
      %c0_19 = arith.constant 0 : index
      %c0_20 = arith.constant 0 : index
      %38 = vector.load %arg6[%37, %c0_19, %c0_20] : memref<2x1x32xf32, #tpu.memory_space<vmem>>, vector<1x1x32xf32>
      %39 = vector.shape_cast %38 : vector<1x1x32xf32> to vector<1x32xf32>
      %40 = arith.index_cast %arg19 : i32 to index
      %c0_21 = arith.constant 0 : index
      %c0_22 = arith.constant 0 : index
      %41 = vector.load %arg7[%40, %c0_21, %c0_22] : memref<2x1x32xf32, #tpu.memory_space<vmem>>, vector<1x1x32xf32>
      %42 = vector.shape_cast %41 : vector<1x1x32xf32> to vector<1x32xf32>
      %cst_23 = arith.constant dense<0.000000e+00> : vector<5xf32>
      %43 = vector.multi_reduction <add>, %arg20, %cst_23 [1] : vector<5x32xf32> to vector<5xf32>
      %44 = vector.shape_cast %43 : vector<5xf32> to vector<5x1xf32>
      %cst_24 = arith.constant 3.200000e+01 : f32
      %45 = vector.broadcast %cst_24 : f32 to vector<5x1xf32>
      %46 = arith.divf %44, %45 : vector<5x1xf32>
      %47 = vector.broadcast %46 : vector<5x1xf32> to vector<5x32xf32>
      %48 = arith.subf %arg20, %47 : vector<5x32xf32>
      %49 = arith.mulf %48, %48 : vector<5x32xf32>
      %cst_25 = arith.constant dense<0.000000e+00> : vector<5xf32>
      %50 = vector.multi_reduction <add>, %49, %cst_25 [1] : vector<5x32xf32> to vector<5xf32>
      %51 = vector.shape_cast %50 : vector<5xf32> to vector<5x1xf32>
      %cst_26 = arith.constant 3.200000e+01 : f32
      %52 = vector.broadcast %cst_26 : f32 to vector<5x1xf32>
      %53 = arith.divf %51, %52 : vector<5x1xf32>
      %54 = vector.broadcast %46 : vector<5x1xf32> to vector<5x32xf32>
      %55 = arith.subf %arg20, %54 : vector<5x32xf32>
      %cst_27 = arith.constant 9.99999974E-6 : f32
      %56 = vector.broadcast %cst_27 : f32 to vector<5x1xf32>
      %57 = arith.addf %53, %56 : vector<5x1xf32>
      %58 = math.rsqrt %57 : vector<5x1xf32>
      %59 = vector.broadcast %58 : vector<5x1xf32> to vector<5x32xf32>
      %60 = arith.mulf %55, %59 : vector<5x32xf32>
      %61 = vector.broadcast %39 : vector<1x32xf32> to vector<5x32xf32>
      %62 = arith.mulf %60, %61 : vector<5x32xf32>
      %63 = vector.broadcast %42 : vector<1x32xf32> to vector<5x32xf32>
      %64 = arith.addf %62, %63 : vector<5x32xf32>
      %65 = arith.truncf %64 : vector<5x32xf32> to vector<5x32xbf16>
      %66 = arith.index_cast %arg19 : i32 to index
      %c0_28 = arith.constant 0 : index
      %c0_29 = arith.constant 0 : index
      %67 = vector.load %arg8[%66, %c0_28, %c0_29] : memref<2x32x96xbf16, #tpu.memory_space<vmem>>, vector<1x32x96xbf16>
      %68 = vector.shape_cast %67 : vector<1x32x96xbf16> to vector<32x96xbf16>
      %cst_30 = arith.constant dense<0.000000e+00> : vector<5x96xf32>
      %69 = tpu.matmul %65, %68, %cst_30 {dimension_numbers = #tpu.dot_dimension_numbers<[1], [0], [0], [1], [0, 0, 1, 1], [], []>} : vector<5x32xbf16>, vector<32x96xbf16>, vector<5x96xf32> -> vector<5x96xf32>
      %70 = arith.index_cast %arg19 : i32 to index
      %c0_31 = arith.constant 0 : index
      %c0_32 = arith.constant 0 : index
      %71 = vector.load %arg9[%70, %c0_31, %c0_32] : memref<2x1x96xf32, #tpu.memory_space<vmem>>, vector<1x1x96xf32>
      %72 = vector.shape_cast %71 : vector<1x1x96xf32> to vector<1x96xf32>
      %73 = vector.broadcast %72 : vector<1x96xf32> to vector<5x96xf32>
      %74 = arith.addf %69, %73 : vector<5x96xf32>
      %75 = vector.extract_strided_slice %74 {offsets = [0, 0], sizes = [5, 32], strides = [1, 1]} : vector<5x96xf32> to vector<5x32xf32>
      %76 = vector.extract_strided_slice %74 {offsets = [0, 32], sizes = [5, 32], strides = [1, 1]} : vector<5x96xf32> to vector<5x32xf32>
      %77 = vector.extract_strided_slice %74 {offsets = [0, 64], sizes = [5, 32], strides = [1, 1]} : vector<5x96xf32> to vector<5x32xf32>
      %78 = vector.extract_strided_slice %75 {offsets = [0, 0], sizes = [5, 8], strides = [1, 1]} : vector<5x32xf32> to vector<5x8xf32>
      %79 = vector.extract_strided_slice %75 {offsets = [0, 8], sizes = [5, 8], strides = [1, 1]} : vector<5x32xf32> to vector<5x8xf32>
      %80 = vector.extract_strided_slice %75 {offsets = [0, 16], sizes = [5, 8], strides = [1, 1]} : vector<5x32xf32> to vector<5x8xf32>
      %81 = vector.extract_strided_slice %75 {offsets = [0, 24], sizes = [5, 8], strides = [1, 1]} : vector<5x32xf32> to vector<5x8xf32>
      %82 = vector.shape_cast %78 : vector<5x8xf32> to vector<1x5x8xf32>
      %83 = vector.shape_cast %79 : vector<5x8xf32> to vector<1x5x8xf32>
      %84 = vector.shape_cast %80 : vector<5x8xf32> to vector<1x5x8xf32>
      %85 = vector.shape_cast %81 : vector<5x8xf32> to vector<1x5x8xf32>
      %86 = tpu.concatenate %82, %83, %84, %85 in 0 : vector<1x5x8xf32>, vector<1x5x8xf32>, vector<1x5x8xf32>, vector<1x5x8xf32> -> vector<4x5x8xf32>
      %87 = vector.extract_strided_slice %76 {offsets = [0, 0], sizes = [5, 8], strides = [1, 1]} : vector<5x32xf32> to vector<5x8xf32>
      %88 = vector.extract_strided_slice %76 {offsets = [0, 8], sizes = [5, 8], strides = [1, 1]} : vector<5x32xf32> to vector<5x8xf32>
      %89 = vector.extract_strided_slice %76 {offsets = [0, 16], sizes = [5, 8], strides = [1, 1]} : vector<5x32xf32> to vector<5x8xf32>
      %90 = vector.extract_strided_slice %76 {offsets = [0, 24], sizes = [5, 8], strides = [1, 1]} : vector<5x32xf32> to vector<5x8xf32>
      %91 = vector.shape_cast %87 : vector<5x8xf32> to vector<1x5x8xf32>
      %92 = vector.shape_cast %88 : vector<5x8xf32> to vector<1x5x8xf32>
      %93 = vector.shape_cast %89 : vector<5x8xf32> to vector<1x5x8xf32>
      %94 = vector.shape_cast %90 : vector<5x8xf32> to vector<1x5x8xf32>
      %95 = tpu.concatenate %91, %92, %93, %94 in 0 : vector<1x5x8xf32>, vector<1x5x8xf32>, vector<1x5x8xf32>, vector<1x5x8xf32> -> vector<4x5x8xf32>
      %96 = vector.extract_strided_slice %77 {offsets = [0, 0], sizes = [5, 8], strides = [1, 1]} : vector<5x32xf32> to vector<5x8xf32>
      %97 = vector.extract_strided_slice %77 {offsets = [0, 8], sizes = [5, 8], strides = [1, 1]} : vector<5x32xf32> to vector<5x8xf32>
      %98 = vector.extract_strided_slice %77 {offsets = [0, 16], sizes = [5, 8], strides = [1, 1]} : vector<5x32xf32> to vector<5x8xf32>
      %99 = vector.extract_strided_slice %77 {offsets = [0, 24], sizes = [5, 8], strides = [1, 1]} : vector<5x32xf32> to vector<5x8xf32>
      %100 = vector.shape_cast %96 : vector<5x8xf32> to vector<1x5x8xf32>
      %101 = vector.shape_cast %97 : vector<5x8xf32> to vector<1x5x8xf32>
      %102 = vector.shape_cast %98 : vector<5x8xf32> to vector<1x5x8xf32>
      %103 = vector.shape_cast %99 : vector<5x8xf32> to vector<1x5x8xf32>
      %104 = tpu.concatenate %100, %101, %102, %103 in 0 : vector<1x5x8xf32>, vector<1x5x8xf32>, vector<1x5x8xf32>, vector<1x5x8xf32> -> vector<4x5x8xf32>
      "tpu.trace_start"() <{level = 10 : i32, message = "hqd,hkd->hqk"}> : () -> ()
      %cst_33 = arith.constant dense<0.000000e+00> : vector<4x5x5xf32>
      %105 = tpu.matmul %86, %95, %cst_33 {dimension_numbers = #tpu.dot_dimension_numbers<[2], [2], [1], [1], [0, 0, 0, 1, 1, 1], [0], [0]>} : vector<4x5x8xf32>, vector<4x5x8xf32>, vector<4x5x5xf32> -> vector<4x5x5xf32>
      "tpu.trace_stop"() : () -> ()
      %cst_34 = arith.constant dense<0xFF800000> : vector<4x5xf32>
      %106 = vector.multi_reduction <maximumf>, %105, %cst_34 [2] : vector<4x5x5xf32> to vector<4x5xf32>
      %107 = vector.shape_cast %106 : vector<4x5xf32> to vector<4x5x1xf32>
      %108 = vector.broadcast %107 : vector<4x5x1xf32> to vector<4x5x5xf32>
      %109 = arith.subf %105, %108 : vector<4x5x5xf32>
      %110 = math.exp %109 : vector<4x5x5xf32>
      %cst_35 = arith.constant dense<0.000000e+00> : vector<4x5xf32>
      %111 = vector.multi_reduction <add>, %110, %cst_35 [2] : vector<4x5x5xf32> to vector<4x5xf32>
      %112 = vector.shape_cast %111 : vector<4x5xf32> to vector<4x5x1xf32>
      %113 = tpu.reciprocal %112 {approx = true} : vector<4x5x1xf32> -> vector<4x5x1xf32>
      %114 = vector.broadcast %113 : vector<4x5x1xf32> to vector<4x5x5xf32>
      %115 = arith.mulf %110, %114 : vector<4x5x5xf32>
      "tpu.trace_start"() <{level = 10 : i32, message = "hqk,hkd->hqd"}> : () -> ()
      %cst_36 = arith.constant dense<0.000000e+00> : vector<4x5x8xf32>
      %116 = tpu.matmul %115, %104, %cst_36 {dimension_numbers = #tpu.dot_dimension_numbers<[2], [1], [1], [2], [0, 0, 0, 1, 1, 2], [0], [0]>} : vector<4x5x5xf32>, vector<4x5x8xf32>, vector<4x5x8xf32> -> vector<4x5x8xf32>
      "tpu.trace_stop"() : () -> ()
      %117 = vector.extract_strided_slice %116 {offsets = [0, 0, 0], sizes = [1, 5, 8], strides = [1, 1, 1]} : vector<4x5x8xf32> to vector<1x5x8xf32>
      %118 = vector.shape_cast %117 : vector<1x5x8xf32> to vector<5x8xf32>
      %119 = vector.extract_strided_slice %116 {offsets = [1, 0, 0], sizes = [1, 5, 8], strides = [1, 1, 1]} : vector<4x5x8xf32> to vector<1x5x8xf32>
      %120 = vector.shape_cast %119 : vector<1x5x8xf32> to vector<5x8xf32>
      %121 = vector.extract_strided_slice %116 {offsets = [2, 0, 0], sizes = [1, 5, 8], strides = [1, 1, 1]} : vector<4x5x8xf32> to vector<1x5x8xf32>
      %122 = vector.shape_cast %121 : vector<1x5x8xf32> to vector<5x8xf32>
      %123 = vector.extract_strided_slice %116 {offsets = [3, 0, 0], sizes = [1, 5, 8], strides = [1, 1, 1]} : vector<4x5x8xf32> to vector<1x5x8xf32>
      %124 = vector.shape_cast %123 : vector<1x5x8xf32> to vector<5x8xf32>
      %125 = tpu.concatenate %118, %120, %122, %124 in 1 : vector<5x8xf32>, vector<5x8xf32>, vector<5x8xf32>, vector<5x8xf32> -> vector<5x32xf32>
      %126 = arith.truncf %125 : vector<5x32xf32> to vector<5x32xbf16>
      %127 = arith.index_cast %arg19 : i32 to index
      %c0_37 = arith.constant 0 : index
      %c0_38 = arith.constant 0 : index
      %128 = vector.load %arg10[%127, %c0_37, %c0_38] : memref<2x32x32xbf16, #tpu.memory_space<vmem>>, vector<1x32x32xbf16>
      %129 = vector.shape_cast %128 : vector<1x32x32xbf16> to vector<32x32xbf16>
      %cst_39 = arith.constant dense<0.000000e+00> : vector<5x32xf32>
      %130 = tpu.matmul %126, %129, %cst_39 {dimension_numbers = #tpu.dot_dimension_numbers<[1], [0], [0], [1], [0, 0, 1, 1], [], []>} : vector<5x32xbf16>, vector<32x32xbf16>, vector<5x32xf32> -> vector<5x32xf32>
      %131 = arith.index_cast %arg19 : i32 to index
      %c0_40 = arith.constant 0 : index
      %c0_41 = arith.constant 0 : index
      %132 = vector.load %arg11[%131, %c0_40, %c0_41] : memref<2x1x32xf32, #tpu.memory_space<vmem>>, vector<1x1x32xf32>
      %133 = vector.shape_cast %132 : vector<1x1x32xf32> to vector<1x32xf32>
      %134 = vector.broadcast %133 : vector<1x32xf32> to vector<5x32xf32>
      %135 = arith.addf %130, %134 : vector<5x32xf32>
      %136 = arith.addf %arg20, %135 : vector<5x32xf32>
      %137 = arith.index_cast %arg19 : i32 to index
      %c0_42 = arith.constant 0 : index
      %c0_43 = arith.constant 0 : index
      %138 = vector.load %arg12[%137, %c0_42, %c0_43] : memref<2x1x32xf32, #tpu.memory_space<vmem>>, vector<1x1x32xf32>
      %139 = vector.shape_cast %138 : vector<1x1x32xf32> to vector<1x32xf32>
      %140 = arith.index_cast %arg19 : i32 to index
      %c0_44 = arith.constant 0 : index
      %c0_45 = arith.constant 0 : index
      %141 = vector.load %arg13[%140, %c0_44, %c0_45] : memref<2x1x32xf32, #tpu.memory_space<vmem>>, vector<1x1x32xf32>
      %142 = vector.shape_cast %141 : vector<1x1x32xf32> to vector<1x32xf32>
      %cst_46 = arith.constant dense<0.000000e+00> : vector<5xf32>
      %143 = vector.multi_reduction <add>, %136, %cst_46 [1] : vector<5x32xf32> to vector<5xf32>
      %144 = vector.shape_cast %143 : vector<5xf32> to vector<5x1xf32>
      %cst_47 = arith.constant 3.200000e+01 : f32
      %145 = vector.broadcast %cst_47 : f32 to vector<5x1xf32>
      %146 = arith.divf %144, %145 : vector<5x1xf32>
      %147 = vector.broadcast %146 : vector<5x1xf32> to vector<5x32xf32>
      %148 = arith.subf %136, %147 : vector<5x32xf32>
      %149 = arith.mulf %148, %148 : vector<5x32xf32>
      %cst_48 = arith.constant dense<0.000000e+00> : vector<5xf32>
      %150 = vector.multi_reduction <add>, %149, %cst_48 [1] : vector<5x32xf32> to vector<5xf32>
      %151 = vector.shape_cast %150 : vector<5xf32> to vector<5x1xf32>
      %cst_49 = arith.constant 3.200000e+01 : f32
      %152 = vector.broadcast %cst_49 : f32 to vector<5x1xf32>
      %153 = arith.divf %151, %152 : vector<5x1xf32>
      %154 = vector.broadcast %146 : vector<5x1xf32> to vector<5x32xf32>
      %155 = arith.subf %136, %154 : vector<5x32xf32>
      %cst_50 = arith.constant 9.99999974E-6 : f32
      %156 = vector.broadcast %cst_50 : f32 to vector<5x1xf32>
      %157 = arith.addf %153, %156 : vector<5x1xf32>
      %158 = math.rsqrt %157 : vector<5x1xf32>
      %159 = vector.broadcast %158 : vector<5x1xf32> to vector<5x32xf32>
      %160 = arith.mulf %155, %159 : vector<5x32xf32>
      %161 = vector.broadcast %139 : vector<1x32xf32> to vector<5x32xf32>
      %162 = arith.mulf %160, %161 : vector<5x32xf32>
      %163 = vector.broadcast %142 : vector<1x32xf32> to vector<5x32xf32>
      %164 = arith.addf %162, %163 : vector<5x32xf32>
      %165 = arith.truncf %164 : vector<5x32xf32> to vector<5x32xbf16>
      %166 = arith.index_cast %arg19 : i32 to index
      %c0_51 = arith.constant 0 : index
      %c0_52 = arith.constant 0 : index
      %167 = vector.load %arg14[%166, %c0_51, %c0_52] : memref<2x32x64xbf16, #tpu.memory_space<vmem>>, vector<1x32x64xbf16>
      %168 = vector.shape_cast %167 : vector<1x32x64xbf16> to vector<32x64xbf16>
      %cst_53 = arith.constant dense<0.000000e+00> : vector<5x64xf32>
      %169 = tpu.matmul %165, %168, %cst_53 {dimension_numbers = #tpu.dot_dimension_numbers<[1], [0], [0], [1], [0, 0, 1, 1], [], []>} : vector<5x32xbf16>, vector<32x64xbf16>, vector<5x64xf32> -> vector<5x64xf32>
      %170 = arith.index_cast %arg19 : i32 to index
      %c0_54 = arith.constant 0 : index
      %c0_55 = arith.constant 0 : index
      %171 = vector.load %arg15[%170, %c0_54, %c0_55] : memref<2x1x64xf32, #tpu.memory_space<vmem>>, vector<1x1x64xf32>
      %172 = vector.shape_cast %171 : vector<1x1x64xf32> to vector<1x64xf32>
      %173 = vector.broadcast %172 : vector<1x64xf32> to vector<5x64xf32>
      %174 = arith.addf %169, %173 : vector<5x64xf32>
      %cst_56 = arith.constant 1.702000e+00 : f32
      %175 = vector.broadcast %cst_56 : f32 to vector<5x64xf32>
      %176 = arith.mulf %175, %174 : vector<5x64xf32>
      %177 = arith.negf %176 : vector<5x64xf32>
      %178 = math.exp %177 : vector<5x64xf32>
      %cst_57 = arith.constant 1.000000e+00 : f32
      %179 = vector.broadcast %cst_57 : f32 to vector<5x64xf32>
      %180 = arith.addf %179, %178 : vector<5x64xf32>
      %181 = arith.divf %179, %180 : vector<5x64xf32>
      %182 = arith.mulf %174, %181 : vector<5x64xf32>
      %183 = arith.truncf %182 : vector<5x64xf32> to vector<5x64xbf16>
      %184 = arith.index_cast %arg19 : i32 to index
      %c0_58 = arith.constant 0 : index
      %c0_59 = arith.constant 0 : index
      %185 = vector.load %arg16[%184, %c0_58, %c0_59] : memref<2x64x32xbf16, #tpu.memory_space<vmem>>, vector<1x64x32xbf16>
      %186 = vector.shape_cast %185 : vector<1x64x32xbf16> to vector<64x32xbf16>
      %cst_60 = arith.constant dense<0.000000e+00> : vector<5x32xf32>
      %187 = tpu.matmul %183, %186, %cst_60 {dimension_numbers = #tpu.dot_dimension_numbers<[1], [0], [0], [1], [0, 0, 1, 1], [], []>} : vector<5x64xbf16>, vector<64x32xbf16>, vector<5x32xf32> -> vector<5x32xf32>
      %188 = arith.index_cast %arg19 : i32 to index
      %c0_61 = arith.constant 0 : index
      %c0_62 = arith.constant 0 : index
      %189 = vector.load %arg17[%188, %c0_61, %c0_62] : memref<2x1x32xf32, #tpu.memory_space<vmem>>, vector<1x1x32xf32>
      %190 = vector.shape_cast %189 : vector<1x1x32xf32> to vector<1x32xf32>
      %191 = vector.broadcast %190 : vector<1x32xf32> to vector<5x32xf32>
      %192 = arith.addf %187, %191 : vector<5x32xf32>
      %193 = arith.addf %136, %192 : vector<5x32xf32>
      scf.yield %193 : vector<5x32xf32>
    }
    %c2_i32_15 = arith.constant 2 : i32
    %33 = vector.extract_strided_slice %32 {offsets = [1, 0], sizes = [4, 32], strides = [1, 1]} : vector<5x32xf32> to vector<4x32xf32>
    %c0_16 = arith.constant 0 : index
    %c0_17 = arith.constant 0 : index
    %c0_18 = arith.constant 0 : index
    %34 = vector.load %arg18[%c0_16, %c0_17, %c0_18] : memref<1x4x32xf32, #tpu.memory_space<vmem>>, vector<1x4x32xf32>
    %35 = vector.shape_cast %34 : vector<1x4x32xf32> to vector<4x32xf32>
    %36 = vector.shape_cast %33 : vector<4x32xf32> to vector<1x4x32xf32>
    tpu.vector_store %arg18[%c0_16, %c0_17, %c0_18], %36 {strides = array<i32>} : memref<1x4x32xf32, #tpu.memory_space<vmem>>, vector<1x4x32xf32>,
    return
  }
  func.func @transform_0(%arg0: i32) -> (i32, i32, i32) {
    %c0_i32 = arith.constant 0 : i32
    %c0_i32_0 = arith.constant 0 : i32
    %c0_i32_1 = arith.constant 0 : i32
    return %arg0, %c0_i32, %c0_i32_0 : i32, i32, i32
  }
  func.func @transform_1(%arg0: i32) -> (i32, i32) {
    %c0_i32 = arith.constant 0 : i32
    %c0_i32_0 = arith.constant 0 : i32
    %c0_i32_1 = arith.constant 0 : i32
    return %c0_i32, %c0_i32_0 : i32, i32
  }
  func.func @transform_2(%arg0: i32) -> (i32, i32) {
    %c0_i32 = arith.constant 0 : i32
    %c0_i32_0 = arith.constant 0 : i32
    %c0_i32_1 = arith.constant 0 : i32
    return %c0_i32, %c0_i32_0 : i32, i32
  }
  func.func @transform_3(%arg0: i32) -> (i32, i32) {
    %c0_i32 = arith.constant 0 : i32
    %c0_i32_0 = arith.constant 0 : i32
    %c0_i32_1 = arith.constant 0 : i32
    return %c0_i32, %c0_i32_0 : i32, i32
  }
  func.func @transform_4(%arg0: i32) -> (i32, i32) {
    %c0_i32 = arith.constant 0 : i32
    %c0_i32_0 = arith.constant 0 : i32
    %c0_i32_1 = arith.constant 0 : i32
    return %c0_i32, %c0_i32_0 : i32, i32
  }
  func.func @transform_5(%arg0: i32) -> (i32, i32, i32) {
    %c0_i32 = arith.constant 0 : i32
    %c0_i32_0 = arith.constant 0 : i32
    %c0_i32_1 = arith.constant 0 : i32
    %c0_i32_2 = arith.constant 0 : i32
    return %c0_i32, %c0_i32_0, %c0_i32_1 : i32, i32, i32
  }
  func.func @transform_6(%arg0: i32) -> (i32, i32, i32) {
    %c0_i32 = arith.constant 0 : i32
    %c0_i32_0 = arith.constant 0 : i32
    %c0_i32_1 = arith.constant 0 : i32
    %c0_i32_2 = arith.constant 0 : i32
    return %c0_i32, %c0_i32_0, %c0_i32_1 : i32, i32, i32
  }
  func.func @transform_7(%arg0: i32) -> (i32, i32, i32) {
    %c0_i32 = arith.constant 0 : i32
    %c0_i32_0 = arith.constant 0 : i32
    %c0_i32_1 = arith.constant 0 : i32
    %c0_i32_2 = arith.constant 0 : i32
    return %c0_i32, %c0_i32_0, %c0_i32_1 : i32, i32, i32
  }
  func.func @transform_8(%arg0: i32) -> (i32, i32, i32) {
    %c0_i32 = arith.constant 0 : i32
    %c0_i32_0 = arith.constant 0 : i32
    %c0_i32_1 = arith.constant 0 : i32
    %c0_i32_2 = arith.constant 0 : i32
    return %c0_i32, %c0_i32_0, %c0_i32_1 : i32, i32, i32
  }
  func.func @transform_9(%arg0: i32) -> (i32, i32, i32) {
    %c0_i32 = arith.constant 0 : i32
    %c0_i32_0 = arith.constant 0 : i32
    %c0_i32_1 = arith.constant 0 : i32
    %c0_i32_2 = arith.constant 0 : i32
    return %c0_i32, %c0_i32_0, %c0_i32_1 : i32, i32, i32
  }
  func.func @transform_10(%arg0: i32) -> (i32, i32, i32) {
    %c0_i32 = arith.constant 0 : i32
    %c0_i32_0 = arith.constant 0 : i32
    %c0_i32_1 = arith.constant 0 : i32
    %c0_i32_2 = arith.constant 0 : i32
    return %c0_i32, %c0_i32_0, %c0_i32_1 : i32, i32, i32
  }
  func.func @transform_11(%arg0: i32) -> (i32, i32, i32) {
    %c0_i32 = arith.constant 0 : i32
    %c0_i32_0 = arith.constant 0 : i32
    %c0_i32_1 = arith.constant 0 : i32
    %c0_i32_2 = arith.constant 0 : i32
    return %c0_i32, %c0_i32_0, %c0_i32_1 : i32, i32, i32
  }
  func.func @transform_12(%arg0: i32) -> (i32, i32, i32) {
    %c0_i32 = arith.constant 0 : i32
    %c0_i32_0 = arith.constant 0 : i32
    %c0_i32_1 = arith.constant 0 : i32
    %c0_i32_2 = arith.constant 0 : i32
    return %c0_i32, %c0_i32_0, %c0_i32_1 : i32, i32, i32
  }
  func.func @transform_13(%arg0: i32) -> (i32, i32, i32) {
    %c0_i32 = arith.constant 0 : i32
    %c0_i32_0 = arith.constant 0 : i32
    %c0_i32_1 = arith.constant 0 : i32
    %c0_i32_2 = arith.constant 0 : i32
    return %c0_i32, %c0_i32_0, %c0_i32_1 : i32, i32, i32
  }
  func.func @transform_14(%arg0: i32) -> (i32, i32, i32) {
    %c0_i32 = arith.constant 0 : i32
    %c0_i32_0 = arith.constant 0 : i32
    %c0_i32_1 = arith.constant 0 : i32
    %c0_i32_2 = arith.constant 0 : i32
    return %c0_i32, %c0_i32_0, %c0_i32_1 : i32, i32, i32
  }
  func.func @transform_15(%arg0: i32) -> (i32, i32, i32) {
    %c0_i32 = arith.constant 0 : i32
    %c0_i32_0 = arith.constant 0 : i32
    %c0_i32_1 = arith.constant 0 : i32
    %c0_i32_2 = arith.constant 0 : i32
    return %c0_i32, %c0_i32_0, %c0_i32_1 : i32, i32, i32
  }
  func.func @transform_16(%arg0: i32) -> (i32, i32, i32) {
    %c0_i32 = arith.constant 0 : i32
    %c0_i32_0 = arith.constant 0 : i32
    %c0_i32_1 = arith.constant 0 : i32
    %c0_i32_2 = arith.constant 0 : i32
    return %c0_i32, %c0_i32_0, %c0_i32_1 : i32, i32, i32
  }
  func.func @transform_17(%arg0: i32) -> (i32, i32, i32) {
    %c0_i32 = arith.constant 0 : i32
    %c0_i32_0 = arith.constant 0 : i32
    %c0_i32_1 = arith.constant 0 : i32
    return %arg0, %c0_i32, %c0_i32_0 : i32, i32, i32
  }
}

</mosaic_0001>

<llo_original>
// kernel: tpu_custom_call.1
$region0: #{tpu_custom_call.1}
  #allocation0 [shape = 'u32[]', space=smem, size = 0x4, offset = 0x4, fixed_abs, tag = 'smem constant byte address 0x4 - core index']
  #allocation1 [shape = 'u32[144,128]{1,0:T(1,128)}', space=vmem, size = 0x12000, scoped, tag = 'internal scratch']
  %s0 = inlined_call_operand.vmem [shape: f32[2,5,192], index: 0, kind: input, shape index: {}]
  %s1 = inlined_call_operand.vmem [shape: bf16[192,32], index: 1, kind: input, shape index: {}]
  %s2 = inlined_call_operand.vmem [shape: f32[5,32], index: 2, kind: input, shape index: {}]
  %s3 = inlined_call_operand.vmem [shape: f32[1,32], index: 3, kind: input, shape index: {}]
  %s4 = inlined_call_operand.vmem [shape: f32[1,32], index: 4, kind: input, shape index: {}]
  %s5 = inlined_call_operand.vmem [shape: f32[2,1,32], index: 5, kind: input, shape index: {}]
  %s6 = inlined_call_operand.vmem [shape: f32[2,1,32], index: 6, kind: input, shape index: {}]
  %s7 = inlined_call_operand.vmem [shape: bf16[2,32,96], index: 7, kind: input, shape index: {}]
  %s8 = inlined_call_operand.vmem [shape: f32[2,1,96], index: 8, kind: input, shape index: {}]
  %s9 = inlined_call_operand.vmem [shape: bf16[2,32,32], index: 9, kind: input, shape index: {}]
  %s10 = inlined_call_operand.vmem [shape: f32[2,1,32], index: 10, kind: input, shape index: {}]
  %s11 = inlined_call_operand.vmem [shape: f32[2,1,32], index: 11, kind: input, shape index: {}]
  %s12 = inlined_call_operand.vmem [shape: f32[2,1,32], index: 12, kind: input, shape index: {}]
  %s13 = inlined_call_operand.vmem [shape: bf16[2,32,64], index: 13, kind: input, shape index: {}]
  %s14 = inlined_call_operand.vmem [shape: f32[2,1,64], index: 14, kind: input, shape index: {}]
  %s15 = inlined_call_operand.vmem [shape: bf16[2,64,32], index: 15, kind: input, shape index: {}]
  %s16 = inlined_call_operand.vmem [shape: f32[2,1,32], index: 16, kind: input, shape index: {}]
  %s17 = inlined_call_operand.hbm [shape: f32[2,4,32], index: 17, kind: output, shape index: {}]
  %s18 = sld [smem:[#allocation0]]
  $region108: #{tpu_custom_call.1} parent=0
    _
  %s20 = ssub.s32 1, %s18
  %s21 = scalar_select 0, %s20, %s18
  $region1: #{tpu_custom_call.1} parent=0
    #allocation2 [shape = 'u8[4096]{0}', space=vmem, size = 0x1000, scoped, tag = 'output window, operand 0']
    #allocation3 [shape = 's32[2]{0}', space=sflag, size = 0x8, scoped, tag = 'scoped memory for tpu_custom_call.1']
    %22 = vsyncpa [#allocation3], 0
    %s23 = scalar_lea.sflag [#allocation3], 1
    %24 = vsyncpa %s23, 0
    loop: start=0, step=1, limit=4
    $region2: #{tpu_custom_call.1} parent=1 // loop_pre_header
      _
    $region3: #{tpu_custom_call.1} parent=1 // loop_header
      %s26 = sphi 0, %s30
      %p27 = scmp.ge.s32.totalorder %s26, 4
      %s36 = sphi 0, %s38
      %s39 = sphi 0, %s36
      %s40 = sphi 0, %s39
      %s56 = sphi 0, %s40
      %s60 = sphi 0, %s60
      %s62 = sphi 0, %s60
      %s63 = sphi 0, %s62
      %s77 = sphi 0, %s63
      %s81 = sphi 0, %s81
      %s83 = sphi 0, %s81
      %s84 = sphi 0, %s83
      %s98 = sphi 0, %s84
      %s102 = sphi 0, %s102
      %s104 = sphi 0, %s102
      %s105 = sphi 0, %s104
      %s119 = sphi 0, %s105
      %s123 = sphi 0, %s123
      %s125 = sphi 0, %s123
      %s126 = sphi 0, %s125
      %s140 = sphi 0, %s126
      %s144 = sphi 0, %s144
      %s146 = sphi 0, %s144
      %s147 = sphi 0, %s146
      %s161 = sphi 0, %s147
      %s165 = sphi 0, %s165
      %s167 = sphi 0, %s165
      %s168 = sphi 0, %s167
      %s182 = sphi 0, %s168
      %s186 = sphi 0, %s186
      %s188 = sphi 0, %s186
      %s189 = sphi 0, %s188
      %s203 = sphi 0, %s189
      %s207 = sphi 0, %s207
      %s209 = sphi 0, %s207
      %s210 = sphi 0, %s209
      %s224 = sphi 0, %s210
      %s228 = sphi 0, %s228
      %s230 = sphi 0, %s228
      %s231 = sphi 0, %s230
      %s245 = sphi 0, %s231
      %s249 = sphi 0, %s249
      %s251 = sphi 0, %s249
      %s252 = sphi 0, %s251
      %s266 = sphi 0, %s252
      %s270 = sphi 0, %s270
      %s272 = sphi 0, %s270
      %s273 = sphi 0, %s272
      %s287 = sphi 0, %s273
      %s291 = sphi 0, %s291
      %s293 = sphi 0, %s291
      %s294 = sphi 0, %s293
      %s308 = sphi 0, %s294
      %s312 = sphi 0, %s312
      %s314 = sphi 0, %s312
      %s315 = sphi 0, %s314
      %s329 = sphi 0, %s315
      %s333 = sphi 0, %s333
      %s335 = sphi 0, %s333
      %s336 = sphi 0, %s335
      %s350 = sphi 0, %s336
      %s354 = sphi 0, %s354
      %s356 = sphi 0, %s354
      %s357 = sphi 0, %s356
      %s371 = sphi 0, %s357
      %s375 = sphi 0, %s375
      %s377 = sphi 0, %s375
      %s378 = sphi 0, %s377
      %s392 = sphi 0, %s378
      %s398 = sphi 0, %s400
      %s401 = sphi 0, %s398
      %s402 = sphi 0, %s401
      %s418 = sphi 0, %s402
    $region4: #{tpu_custom_call.1} parent=1 // loop_header_branch
      %29 = sbr.rel (%p27) target = $region8
    $region5: #{tpu_custom_call.1} parent=1 // loop_body
      %s31 = ssub.s32 %s26, 1
      %s32 = ssub.s32 %s26, 2
      %s33 = sadd.s32 %s26, 1
      %s34 = ssub.s32 %s26, %s33
      %p35 = scmp.eq.s32.totalorder %s34, 0
      %s37 = sadd.s32 %s36, 1
      %s38 = scalar_select %p35, %s36, %s37
      %p41 = pneg %p35
      %p42 = scmp.eq.s32.totalorder %s26, 1
      %p43 = por %p41, %p42
      %p44 = scmp.ne.s32.totalorder %s36, %s39
      %p45 = scmp.eq.s32.totalorder %s26, 0
      %p46 = por %p44, %p45
      %p47 = scmp.ne.s32.totalorder %s36, %s39
      %p48 = scmp.eq.s32.totalorder %s31, 1
      %p49 = por %p47, %p48
      %p50 = scmp.ne.s32.totalorder %s39, %s40
      %p51 = scmp.eq.s32.totalorder %s31, 0
      %p52 = por %p50, %p51
      %p53 = scmp.ne.s32.totalorder %s39, %s40
      %p54 = scmp.eq.s32.totalorder %s32, 1
      %p55 = por %p53, %p54
      %p57 = scmp.ne.s32.totalorder %s40, %s56
      %p58 = scmp.eq.s32.totalorder %s32, 0
      %p59 = por %p57, %p58
      %s61 = sadd.s32 %s60, 1
      %p64 = scmp.eq.s32.totalorder %s26, 1
      %p65 = scmp.ne.s32.totalorder %s60, %s62
      %p66 = scmp.eq.s32.totalorder %s26, 0
      %p67 = por %p65, %p66
      %p68 = scmp.ne.s32.totalorder %s60, %s62
      %p69 = scmp.eq.s32.totalorder %s31, 1
      %p70 = por %p68, %p69
      %p71 = scmp.ne.s32.totalorder %s62, %s63
      %p72 = scmp.eq.s32.totalorder %s31, 0
      %p73 = por %p71, %p72
      %p74 = scmp.ne.s32.totalorder %s62, %s63
      %p75 = scmp.eq.s32.totalorder %s32, 1
      %p76 = por %p74, %p75
      %p78 = scmp.ne.s32.totalorder %s63, %s77
      %p79 = scmp.eq.s32.totalorder %s32, 0
      %p80 = por %p78, %p79
      %s82 = sadd.s32 %s81, 1
      %p85 = scmp.eq.s32.totalorder %s26, 1
      %p86 = scmp.ne.s32.totalorder %s81, %s83
      %p87 = scmp.eq.s32.totalorder %s26, 0
      %p88 = por %p86, %p87
      %p89 = scmp.ne.s32.totalorder %s81, %s83
      %p90 = scmp.eq.s32.totalorder %s31, 1
      %p91 = por %p89, %p90
      %p92 = scmp.ne.s32.totalorder %s83, %s84
      %p93 = scmp.eq.s32.totalorder %s31, 0
      %p94 = por %p92, %p93
      %p95 = scmp.ne.s32.totalorder %s83, %s84
      %p96 = scmp.eq.s32.totalorder %s32, 1
      %p97 = por %p95, %p96
      %p99 = scmp.ne.s32.totalorder %s84, %s98
      %p100 = scmp.eq.s32.totalorder %s32, 0
      %p101 = por %p99, %p100
      %s103 = sadd.s32 %s102, 1
      %p106 = scmp.eq.s32.totalorder %s26, 1
      %p107 = scmp.ne.s32.totalorder %s102, %s104
      %p108 = scmp.eq.s32.totalorder %s26, 0
      %p109 = por %p107, %p108
      %p110 = scmp.ne.s32.totalorder %s102, %s104
      %p111 = scmp.eq.s32.totalorder %s31, 1
      %p112 = por %p110, %p111
      %p113 = scmp.ne.s32.totalorder %s104, %s105
      %p114 = scmp.eq.s32.totalorder %s31, 0
      %p115 = por %p113, %p114
      %p116 = scmp.ne.s32.totalorder %s104, %s105
      %p117 = scmp.eq.s32.totalorder %s32, 1
      %p118 = por %p116, %p117
      %p120 = scmp.ne.s32.totalorder %s105, %s119
      %p121 = scmp.eq.s32.totalorder %s32, 0
      %p122 = por %p120, %p121
      %s124 = sadd.s32 %s123, 1
      %p127 = scmp.eq.s32.totalorder %s26, 1
      %p128 = scmp.ne.s32.totalorder %s123, %s125
      %p129 = scmp.eq.s32.totalorder %s26, 0
      %p130 = por %p128, %p129
      %p131 = scmp.ne.s32.totalorder %s123, %s125
      %p132 = scmp.eq.s32.totalorder %s31, 1
      %p133 = por %p131, %p132
      %p134 = scmp.ne.s32.totalorder %s125, %s126
      %p135 = scmp.eq.s32.totalorder %s31, 0
      %p136 = por %p134, %p135
      %p137 = scmp.ne.s32.totalorder %s125, %s126
      %p138 = scmp.eq.s32.totalorder %s32, 1
      %p139 = por %p137, %p138
      %p141 = scmp.ne.s32.totalorder %s126, %s140
      %p142 = scmp.eq.s32.totalorder %s32, 0
      %p143 = por %p141, %p142
      %s145 = sadd.s32 %s144, 1
      %p148 = scmp.eq.s32.totalorder %s26, 1
      %p149 = scmp.ne.s32.totalorder %s144, %s146
      %p150 = scmp.eq.s32.totalorder %s26, 0
      %p151 = por %p149, %p150
      %p152 = scmp.ne.s32.totalorder %s144, %s146
      %p153 = scmp.eq.s32.totalorder %s31, 1
      %p154 = por %p152, %p153
      %p155 = scmp.ne.s32.totalorder %s146, %s147
      %p156 = scmp.eq.s32.totalorder %s31, 0
      %p157 = por %p155, %p156
      %p158 = scmp.ne.s32.totalorder %s146, %s147
      %p159 = scmp.eq.s32.totalorder %s32, 1
      %p160 = por %p158, %p159
      %p162 = scmp.ne.s32.totalorder %s147, %s161
      %p163 = scmp.eq.s32.totalorder %s32, 0
      %p164 = por %p162, %p163
      %s166 = sadd.s32 %s165, 1
      %p169 = scmp.eq.s32.totalorder %s26, 1
      %p170 = scmp.ne.s32.totalorder %s165, %s167
      %p171 = scmp.eq.s32.totalorder %s26, 0
      %p172 = por %p170, %p171
      %p173 = scmp.ne.s32.totalorder %s165, %s167
      %p174 = scmp.eq.s32.totalorder %s31, 1
      %p175 = por %p173, %p174
      %p176 = scmp.ne.s32.totalorder %s167, %s168
      %p177 = scmp.eq.s32.totalorder %s31, 0
      %p178 = por %p176, %p177
      %p179 = scmp.ne.s32.totalorder %s167, %s168
      %p180 = scmp.eq.s32.totalorder %s32, 1
      %p181 = por %p179, %p180
      %p183 = scmp.ne.s32.totalorder %s168, %s182
      %p184 = scmp.eq.s32.totalorder %s32, 0
      %p185 = por %p183, %p184
      %s187 = sadd.s32 %s186, 1
      %p190 = scmp.eq.s32.totalorder %s26, 1
      %p191 = scmp.ne.s32.totalorder %s186, %s188
      %p192 = scmp.eq.s32.totalorder %s26, 0
      %p193 = por %p191, %p192
      %p194 = scmp.ne.s32.totalorder %s186, %s188
      %p195 = scmp.eq.s32.totalorder %s31, 1
      %p196 = por %p194, %p195
      %p197 = scmp.ne.s32.totalorder %s188, %s189
      %p198 = scmp.eq.s32.totalorder %s31, 0
      %p199 = por %p197, %p198
      %p200 = scmp.ne.s32.totalorder %s188, %s189
      %p201 = scmp.eq.s32.totalorder %s32, 1
      %p202 = por %p200, %p201
      %p204 = scmp.ne.s32.totalorder %s189, %s203
      %p205 = scmp.eq.s32.totalorder %s32, 0
      %p206 = por %p204, %p205
      %s208 = sadd.s32 %s207, 1
      %p211 = scmp.eq.s32.totalorder %s26, 1
      %p212 = scmp.ne.s32.totalorder %s207, %s209
      %p213 = scmp.eq.s32.totalorder %s26, 0
      %p214 = por %p212, %p213
      %p215 = scmp.ne.s32.totalorder %s207, %s209
      %p216 = scmp.eq.s32.totalorder %s31, 1
      %p217 = por %p215, %p216
      %p218 = scmp.ne.s32.totalorder %s209, %s210
      %p219 = scmp.eq.s32.totalorder %s31, 0
      %p220 = por %p218, %p219
      %p221 = scmp.ne.s32.totalorder %s209, %s210
      %p222 = scmp.eq.s32.totalorder %s32, 1
      %p223 = por %p221, %p222
      %p225 = scmp.ne.s32.totalorder %s210, %s224
      %p226 = scmp.eq.s32.totalorder %s32, 0
      %p227 = por %p225, %p226
      %s229 = sadd.s32 %s228, 1
      %p232 = scmp.eq.s32.totalorder %s26, 1
      %p233 = scmp.ne.s32.totalorder %s228, %s230
      %p234 = scmp.eq.s32.totalorder %s26, 0
      %p235 = por %p233, %p234
      %p236 = scmp.ne.s32.totalorder %s228, %s230
      %p237 = scmp.eq.s32.totalorder %s31, 1
      %p238 = por %p236, %p237
      %p239 = scmp.ne.s32.totalorder %s230, %s231
      %p240 = scmp.eq.s32.totalorder %s31, 0
      %p241 = por %p239, %p240
      %p242 = scmp.ne.s32.totalorder %s230, %s231
      %p243 = scmp.eq.s32.totalorder %s32, 1
      %p244 = por %p242, %p243
      %p246 = scmp.ne.s32.totalorder %s231, %s245
      %p247 = scmp.eq.s32.totalorder %s32, 0
      %p248 = por %p246, %p247
      %s250 = sadd.s32 %s249, 1
      %p253 = scmp.eq.s32.totalorder %s26, 1
      %p254 = scmp.ne.s32.totalorder %s249, %s251
      %p255 = scmp.eq.s32.totalorder %s26, 0
      %p256 = por %p254, %p255
      %p257 = scmp.ne.s32.totalorder %s249, %s251
      %p258 = scmp.eq.s32.totalorder %s31, 1
      %p259 = por %p257, %p258
      %p260 = scmp.ne.s32.totalorder %s251, %s252
      %p261 = scmp.eq.s32.totalorder %s31, 0
      %p262 = por %p260, %p261
      %p263 = scmp.ne.s32.totalorder %s251, %s252
      %p264 = scmp.eq.s32.totalorder %s32, 1
      %p265 = por %p263, %p264
      %p267 = scmp.ne.s32.totalorder %s252, %s266
      %p268 = scmp.eq.s32.totalorder %s32, 0
      %p269 = por %p267, %p268
      %s271 = sadd.s32 %s270, 1
      %p274 = scmp.eq.s32.totalorder %s26, 1
      %p275 = scmp.ne.s32.totalorder %s270, %s272
      %p276 = scmp.eq.s32.totalorder %s26, 0
      %p277 = por %p275, %p276
      %p278 = scmp.ne.s32.totalorder %s270, %s272
      %p279 = scmp.eq.s32.totalorder %s31, 1
      %p280 = por %p278, %p279
      %p281 = scmp.ne.s32.totalorder %s272, %s273
      %p282 = scmp.eq.s32.totalorder %s31, 0
      %p283 = por %p281, %p282
      %p284 = scmp.ne.s32.totalorder %s272, %s273
      %p285 = scmp.eq.s32.totalorder %s32, 1
      %p286 = por %p284, %p285
      %p288 = scmp.ne.s32.totalorder %s273, %s287
      %p289 = scmp.eq.s32.totalorder %s32, 0
      %p290 = por %p288, %p289
      %s292 = sadd.s32 %s291, 1
      %p295 = scmp.eq.s32.totalorder %s26, 1
      %p296 = scmp.ne.s32.totalorder %s291, %s293
      %p297 = scmp.eq.s32.totalorder %s26, 0
      %p298 = por %p296, %p297
      %p299 = scmp.ne.s32.totalorder %s291, %s293
      %p300 = scmp.eq.s32.totalorder %s31, 1
      %p301 = por %p299, %p300
      %p302 = scmp.ne.s32.totalorder %s293, %s294
      %p303 = scmp.eq.s32.totalorder %s31, 0
      %p304 = por %p302, %p303
      %p305 = scmp.ne.s32.totalorder %s293, %s294
      %p306 = scmp.eq.s32.totalorder %s32, 1
      %p307 = por %p305, %p306
      %p309 = scmp.ne.s32.totalorder %s294, %s308
      %p310 = scmp.eq.s32.totalorder %s32, 0
      %p311 = por %p309, %p310
      %s313 = sadd.s32 %s312, 1
      %p316 = scmp.eq.s32.totalorder %s26, 1
      %p317 = scmp.ne.s32.totalorder %s312, %s314
      %p318 = scmp.eq.s32.totalorder %s26, 0
      %p319 = por %p317, %p318
      %p320 = scmp.ne.s32.totalorder %s312, %s314
      %p321 = scmp.eq.s32.totalorder %s31, 1
      %p322 = por %p320, %p321
      %p323 = scmp.ne.s32.totalorder %s314, %s315
      %p324 = scmp.eq.s32.totalorder %s31, 0
      %p325 = por %p323, %p324
      %p326 = scmp.ne.s32.totalorder %s314, %s315
      %p327 = scmp.eq.s32.totalorder %s32, 1
      %p328 = por %p326, %p327
      %p330 = scmp.ne.s32.totalorder %s315, %s329
      %p331 = scmp.eq.s32.totalorder %s32, 0
      %p332 = por %p330, %p331
      %s334 = sadd.s32 %s333, 1
      %p337 = scmp.eq.s32.totalorder %s26, 1
      %p338 = scmp.ne.s32.totalorder %s333, %s335
      %p339 = scmp.eq.s32.totalorder %s26, 0
      %p340 = por %p338, %p339
      %p341 = scmp.ne.s32.totalorder %s333, %s335
      %p342 = scmp.eq.s32.totalorder %s31, 1
      %p343 = por %p341, %p342
      %p344 = scmp.ne.s32.totalorder %s335, %s336
      %p345 = scmp.eq.s32.totalorder %s31, 0
      %p346 = por %p344, %p345
      %p347 = scmp.ne.s32.totalorder %s335, %s336
      %p348 = scmp.eq.s32.totalorder %s32, 1
      %p349 = por %p347, %p348
      %p351 = scmp.ne.s32.totalorder %s336, %s350
      %p352 = scmp.eq.s32.totalorder %s32, 0
      %p353 = por %p351, %p352
      %s355 = sadd.s32 %s354, 1
      %p358 = scmp.eq.s32.totalorder %s26, 1
      %p359 = scmp.ne.s32.totalorder %s354, %s356
      %p360 = scmp.eq.s32.totalorder %s26, 0
      %p361 = por %p359, %p360
      %p362 = scmp.ne.s32.totalorder %s354, %s356
      %p363 = scmp.eq.s32.totalorder %s31, 1
      %p364 = por %p362, %p363
      %p365 = scmp.ne.s32.totalorder %s356, %s357
      %p366 = scmp.eq.s32.totalorder %s31, 0
      %p367 = por %p365, %p366
      %p368 = scmp.ne.s32.totalorder %s356, %s357
      %p369 = scmp.eq.s32.totalorder %s32, 1
      %p370 = por %p368, %p369
      %p372 = scmp.ne.s32.totalorder %s357, %s371
      %p373 = scmp.eq.s32.totalorder %s32, 0
      %p374 = por %p372, %p373
      %s376 = sadd.s32 %s375, 1
      %p379 = scmp.eq.s32.totalorder %s26, 1
      %p380 = scmp.ne.s32.totalorder %s375, %s377
      %p381 = scmp.eq.s32.totalorder %s26, 0
      %p382 = por %p380, %p381
      %p383 = scmp.ne.s32.totalorder %s375, %s377
      %p384 = scmp.eq.s32.totalorder %s31, 1
      %p385 = por %p383, %p384
      %p386 = scmp.ne.s32.totalorder %s377, %s378
      %p387 = scmp.eq.s32.totalorder %s31, 0
      %p388 = por %p386, %p387
      %p389 = scmp.ne.s32.totalorder %s377, %s378
      %p390 = scmp.eq.s32.totalorder %s32, 1
      %p391 = por %p389, %p390
      %p393 = scmp.ne.s32.totalorder %s378, %s392
      %p394 = scmp.eq.s32.totalorder %s32, 0
      %p395 = por %p393, %p394
      %s396 = ssub.s32 %s26, %s33
      %p397 = scmp.eq.s32.totalorder %s396, 0
      %s399 = sadd.s32 %s398, 1
      %s400 = scalar_select %p397, %s398, %s399
      %p403 = pneg %p397
      %p404 = scmp.eq.s32.totalorder %s26, 1
      %p405 = por %p403, %p404
      %p406 = scmp.ne.s32.totalorder %s398, %s401
      %p407 = scmp.eq.s32.totalorder %s26, 0
      %p408 = por %p406, %p407
      %p409 = scmp.ne.s32.totalorder %s398, %s401
      %p410 = scmp.eq.s32.totalorder %s31, 1
      %p411 = por %p409, %p410
      %p412 = scmp.ne.s32.totalorder %s401, %s402
      %p413 = scmp.eq.s32.totalorder %s31, 0
      %p414 = por %p412, %p413
      %p415 = scmp.ne.s32.totalorder %s401, %s402
      %p416 = scmp.eq.s32.totalorder %s32, 1
      %p417 = por %p415, %p416
      %p419 = scmp.ne.s32.totalorder %s402, %s418
      %p420 = scmp.eq.s32.totalorder %s32, 0
      %p421 = por %p419, %p420
      %p422 = scmp.le.s32.totalorder 1, %s26
      %p423 = scmp.lt.s32.totalorder %s26, 3
      %p424 = pnand %p422, %p423
      %p425 = pneg %p424
      // Predicated region
      $region9: #{tpu_custom_call.1} parent=5 // pred_check
        _
      $region10: #{tpu_custom_call.1} parent=5 // pred_check_branch
        %427 = sbr.rel (%p424) target = $region12
      $region11: #{tpu_custom_call.1} parent=5 // pred_region
        %s428 = ssub.s32 %s26, 1
        // Predicated region
        $region13: #{tpu_custom_call.1} parent=11 // pred_check
          %p429 = pneg %p73
        $region14: #{tpu_custom_call.1} parent=11 // pred_check_branch
          %431 = sbr.rel (%p429) target = $region16
        $region15: #{tpu_custom_call.1} parent=11 // pred_region
          _
        $region16: #{tpu_custom_call.1} parent=11 // pred_fallthru
          _
        // Predicated region
        $region17: #{tpu_custom_call.1} parent=11 // pred_check
          %p432 = pneg %p94
        $region18: #{tpu_custom_call.1} parent=11 // pred_check_branch
          %434 = sbr.rel (%p432) target = $region20
        $region19: #{tpu_custom_call.1} parent=11 // pred_region
          _
        $region20: #{tpu_custom_call.1} parent=11 // pred_fallthru
          _
        // Predicated region
        $region21: #{tpu_custom_call.1} parent=11 // pred_check
          %p435 = pneg %p115
        $region22: #{tpu_custom_call.1} parent=11 // pred_check_branch
          %437 = sbr.rel (%p435) target = $region24
        $region23: #{tpu_custom_call.1} parent=11 // pred_region
          _
        $region24: #{tpu_custom_call.1} parent=11 // pred_fallthru
          _
        // Predicated region
        $region25: #{tpu_custom_call.1} parent=11 // pred_check
          %p438 = pneg %p136
        $region26: #{tpu_custom_call.1} parent=11 // pred_check_branch
          %440 = sbr.rel (%p438) target = $region28
        $region27: #{tpu_custom_call.1} parent=11 // pred_region
          _
        $region28: #{tpu_custom_call.1} parent=11 // pred_fallthru
          _
        // Predicated region
        $region29: #{tpu_custom_call.1} parent=11 // pred_check
          %p441 = pneg %p157
        $region30: #{tpu_custom_call.1} parent=11 // pred_check_branch
          %443 = sbr.rel (%p441) target = $region32
        $region31: #{tpu_custom_call.1} parent=11 // pred_region
          _
        $region32: #{tpu_custom_call.1} parent=11 // pred_fallthru
          _
        // Predicated region
        $region33: #{tpu_custom_call.1} parent=11 // pred_check
          %p444 = pneg %p178
        $region34: #{tpu_custom_call.1} parent=11 // pred_check_branch
          %446 = sbr.rel (%p444) target = $region36
        $region35: #{tpu_custom_call.1} parent=11 // pred_region
          _
        $region36: #{tpu_custom_call.1} parent=11 // pred_fallthru
          _
        // Predicated region
        $region37: #{tpu_custom_call.1} parent=11 // pred_check
          %p447 = pneg %p199
        $region38: #{tpu_custom_call.1} parent=11 // pred_check_branch
          %449 = sbr.rel (%p447) target = $region40
        $region39: #{tpu_custom_call.1} parent=11 // pred_region
          _
        $region40: #{tpu_custom_call.1} parent=11 // pred_fallthru
          _
        // Predicated region
        $region41: #{tpu_custom_call.1} parent=11 // pred_check
          %p450 = pneg %p220
        $region42: #{tpu_custom_call.1} parent=11 // pred_check_branch
          %452 = sbr.rel (%p450) target = $region44
        $region43: #{tpu_custom_call.1} parent=11 // pred_region
          _
        $region44: #{tpu_custom_call.1} parent=11 // pred_fallthru
          _
        // Predicated region
        $region45: #{tpu_custom_call.1} parent=11 // pred_check
          %p453 = pneg %p241
        $region46: #{tpu_custom_call.1} parent=11 // pred_check_branch
          %455 = sbr.rel (%p453) target = $region48
        $region47: #{tpu_custom_call.1} parent=11 // pred_region
          _
        $region48: #{tpu_custom_call.1} parent=11 // pred_fallthru
          _
        // Predicated region
        $region49: #{tpu_custom_call.1} parent=11 // pred_check
          %p456 = pneg %p262
        $region50: #{tpu_custom_call.1} parent=11 // pred_check_branch
          %458 = sbr.rel (%p456) target = $region52
        $region51: #{tpu_custom_call.1} parent=11 // pred_region
          _
        $region52: #{tpu_custom_call.1} parent=11 // pred_fallthru
          _
        // Predicated region
        $region53: #{tpu_custom_call.1} parent=11 // pred_check
          %p459 = pneg %p283
        $region54: #{tpu_custom_call.1} parent=11 // pred_check_branch
          %461 = sbr.rel (%p459) target = $region56
        $region55: #{tpu_custom_call.1} parent=11 // pred_region
          _
        $region56: #{tpu_custom_call.1} parent=11 // pred_fallthru
          _
        // Predicated region
        $region57: #{tpu_custom_call.1} parent=11 // pred_check
          %p462 = pneg %p304
        $region58: #{tpu_custom_call.1} parent=11 // pred_check_branch
          %464 = sbr.rel (%p462) target = $region60
        $region59: #{tpu_custom_call.1} parent=11 // pred_region
          _
        $region60: #{tpu_custom_call.1} parent=11 // pred_fallthru
          _
        // Predicated region
        $region61: #{tpu_custom_call.1} parent=11 // pred_check
          %p465 = pneg %p325
        $region62: #{tpu_custom_call.1} parent=11 // pred_check_branch
          %467 = sbr.rel (%p465) target = $region64
        $region63: #{tpu_custom_call.1} parent=11 // pred_region
          _
        $region64: #{tpu_custom_call.1} parent=11 // pred_fallthru
          _
        // Predicated region
        $region65: #{tpu_custom_call.1} parent=11 // pred_check
          %p468 = pneg %p346
        $region66: #{tpu_custom_call.1} parent=11 // pred_check_branch
          %470 = sbr.rel (%p468) target = $region68
        $region67: #{tpu_custom_call.1} parent=11 // pred_region
          _
        $region68: #{tpu_custom_call.1} parent=11 // pred_fallthru
          _
        // Predicated region
        $region69: #{tpu_custom_call.1} parent=11 // pred_check
          %p471 = pneg %p367
        $region70: #{tpu_custom_call.1} parent=11 // pred_check_branch
          %473 = sbr.rel (%p471) target = $region72
        $region71: #{tpu_custom_call.1} parent=11 // pred_region
          _
        $region72: #{tpu_custom_call.1} parent=11 // pred_fallthru
          _
        // Predicated region
        $region73: #{tpu_custom_call.1} parent=11 // pred_check
          %p474 = pneg %p388
        $region74: #{tpu_custom_call.1} parent=11 // pred_check_branch
          %476 = sbr.rel (%p474) target = $region76
        $region75: #{tpu_custom_call.1} parent=11 // pred_region
          _
        $region76: #{tpu_custom_call.1} parent=11 // pred_fallthru
          _
      $region12: #{tpu_custom_call.1} parent=5 // pred_fallthru
        _
      %p477 = scmp.lt.s32.totalorder %s26, 2
      // Predicated region
      $region77: #{tpu_custom_call.1} parent=5 // pred_check
        %p478 = pneg %p477
      $region78: #{tpu_custom_call.1} parent=5 // pred_check_branch
        %480 = sbr.rel (%p478) target = $region80
      $region79: #{tpu_custom_call.1} parent=5 // pred_region
        // Predicated region
        $region81: #{tpu_custom_call.1} parent=79 // pred_check
          %p481 = pneg %p46
        $region82: #{tpu_custom_call.1} parent=79 // pred_check_branch
          %483 = sbr.rel (%p481) target = $region84
        $region83: #{tpu_custom_call.1} parent=79 // pred_region
          %p484 = scmp.lt.s32.totalorder %s26, 1
          %s485 = scalar_select %p484, %s26, 1
          %s486 = smul.addr %s485, 2
          %s487 = smul.addr %s486, 8
          %s488 = scalar_lea.vmem %s0, %s487
        $region84: #{tpu_custom_call.1} parent=79 // pred_fallthru
          _
      $region80: #{tpu_custom_call.1} parent=5 // pred_fallthru
        _
      %p489 = scmp.le.s32.totalorder 1, %s26
      %p490 = scmp.lt.s32.totalorder %s26, 3
      %p491 = pnand %p489, %p490
      %p492 = pneg %p491
      // Predicated region
      $region85: #{tpu_custom_call.1} parent=5 // pred_check
        _
      $region86: #{tpu_custom_call.1} parent=5 // pred_check_branch
        %494 = sbr.rel (%p491) target = $region88
      $region87: #{tpu_custom_call.1} parent=5 // pred_region
        %s495 = ssub.s32 %s26, 1
        %p496 = scmp.lt.s32.totalorder %s31, 1
        %s497 = scalar_select %p496, %s31, 1
        %s498 = smul.addr %s497, 2
        %s499 = smul.addr %s498, 8
        %s500 = scalar_lea.vmem %s0, %s499
        %p501 = pneg %p52
        %p502 = pneg %p49
        %p503 = pneg %p73
        %p504 = pneg %p70
        %p505 = pneg %p94
        %p506 = pneg %p91
        %p507 = pneg %p115
        %p508 = pneg %p112
        %p509 = pneg %p136
        %p510 = pneg %p133
        %p511 = pneg %p157
        %p512 = pneg %p154
        %p513 = pneg %p178
        %p514 = pneg %p175
        %p515 = pneg %p199
        %p516 = pneg %p196
        %p517 = pneg %p220
        %p518 = pneg %p217
        %p519 = pneg %p241
        %p520 = pneg %p238
        %p521 = pneg %p262
        %p522 = pneg %p259
        %p523 = pneg %p283
        %p524 = pneg %p280
        %p525 = pneg %p304
        %p526 = pneg %p301
        %p527 = pneg %p325
        %p528 = pneg %p322
        %p529 = pneg %p346
        %p530 = pneg %p343
        %p531 = pneg %p367
        %p532 = pneg %p364
        %p533 = pneg %p388
        %p534 = pneg %p385
        %p535 = pneg %p414
        %p536 = pneg %p411
        %s537 = sand.u32 %s401, 1
        %s538 = scalar_lea.sflag [#allocation3], %s537
        %s539 = sand.u32 %s401, 1
        %s540 = smul.addr %s539, 4
        %s541 = scalar_lea.vmem [#allocation2], %s540
        %p542 = scmp.lt.s32.totalorder %s31, 1
        %s543 = scalar_select %p542, %s31, 1
        %s544 = smul.addr %s543, 2
        %s545 = smul.addr %s544, 8
        %s546 = scalar_lea.vmem %s0, %s545
        %v548 = vld [vmem:[%s546] sm:$0x1f]
        %v549 = vld [vmem:[%s546 + $0x8] sm:$0x1f]
        %v550 = vpack.c.bf16 %v548, %v548
        %v551 = vpack.c.bf16 %v549, %v549
        %v552 = vld [vmem:[%s1] sm:$0xf]
        %v553 = vld [vmem:[%s1 + $0x4] sm:$0xf]
        %v554 = vld [vmem:[%s1 + $0x8] sm:$0xf]
        %v555 = vld [vmem:[%s1 + $0xc] sm:$0xf]
        %v556 = vld [vmem:[%s1 + $0x10] sm:$0xf]
        %v557 = vld [vmem:[%s1 + $0x14] sm:$0xf]
        %v558 = vld [vmem:[%s1 + $0x18] sm:$0xf]
        %v559 = vld [vmem:[%s1 + $0x1c] sm:$0xf]
        %v560 = vld [vmem:[%s1 + $0x20] sm:$0xf]
        %v561 = vld [vmem:[%s1 + $0x24] sm:$0xf]
        %v562 = vld [vmem:[%s1 + $0x28] sm:$0xf]
        %v563 = vld [vmem:[%s1 + $0x2c] sm:$0xf]
        %v564 = vld [vmem:[%s1 + $0x30] sm:$0xf]
        %v565 = vld [vmem:[%s1 + $0x34] sm:$0xf]
        %v566 = vld [vmem:[%s1 + $0x38] sm:$0xf]
        %v567 = vld [vmem:[%s1 + $0x3c] sm:$0xf]
        %v568 = vld [vmem:[%s1 + $0x40] sm:$0xf]
        %v569 = vld [vmem:[%s1 + $0x44] sm:$0xf]
        %v570 = vld [vmem:[%s1 + $0x48] sm:$0xf]
        %v571 = vld [vmem:[%s1 + $0x4c] sm:$0xf]
        %v572 = vld [vmem:[%s1 + $0x50] sm:$0xf]
        %v573 = vld [vmem:[%s1 + $0x54] sm:$0xf]
        %v574 = vld [vmem:[%s1 + $0x58] sm:$0xf]
        %v575 = vld [vmem:[%s1 + $0x5c] sm:$0xf]
        %v576 = vld [vmem:[%s2] sm:$0x1f]
        %v601 = vunpack.c.l.b16 %v552
        %v602 = vunpack.c.l.b16 %v553
        %v603 = vunpack.c.l.b16 %v554
        %v604 = vunpack.c.l.b16 %v555
        %v605 = vunpack.c.l.b16 %v556
        %v606 = vunpack.c.l.b16 %v557
        %v607 = vunpack.c.l.b16 %v558
        %v608 = vunpack.c.l.b16 %v559
        %v609 = vunpack.c.l.b16 %v560
        %v610 = vunpack.c.l.b16 %v561
        %v611 = vunpack.c.l.b16 %v562
        %v612 = vunpack.c.l.b16 %v563
        %v613 = vunpack.c.l.b16 %v564
        %v614 = vunpack.c.l.b16 %v565
        %v615 = vunpack.c.l.b16 %v566
        %v616 = vunpack.c.l.b16 %v567
        %v617 = vunpack.c.l.b16 %v568
        %v618 = vunpack.c.l.b16 %v569
        %v619 = vunpack.c.l.b16 %v570
        %v620 = vunpack.c.l.b16 %v571
        %v621 = vunpack.c.l.b16 %v572
        %v622 = vunpack.c.l.b16 %v573
        %v623 = vunpack.c.l.b16 %v574
        %v624 = vunpack.c.l.b16 %v575
        %v625 = vpack.c.b16 %v602, %v601
        %v626 = vpack.c.b16 %v604, %v603
        %v627 = vpack.c.b16 %v606, %v605
        %v628 = vpack.c.b16 %v608, %v607
        %v629 = vpack.c.b16 %v610, %v609
        %v630 = vpack.c.b16 %v612, %v611
        %v631 = vpack.c.b16 %v614, %v613
        %v632 = vpack.c.b16 %v616, %v615
        %v633 = vpack.c.b16 %v618, %v617
        %v634 = vpack.c.b16 %v620, %v619
        %v635 = vpack.c.b16 %v622, %v621
        %v636 = vpack.c.b16 %v624, %v623
        %vm649 = vcmask 523264
        %v651 = vsel %vm649, %v551, 0
        %653 = vmatprep.subr.bf16.mxu0 0
        %654 = vmatpush1.bf16.msra.mxu0 %v625
        %655 = vmatprep.subr.bf16.mxu0 0
        %656 = vmatpush1.bf16.msra.mxu0 %v626
        %657 = vmatprep.subr.bf16.mxu0 0
        %658 = vmatpush1.bf16.msra.mxu0 %v627
        %659 = vmatprep.subr.bf16.mxu0 0
        %660 = vmatpush1.bf16.msra.mxu0 %v628
        %661 = vmatprep.subr.bf16.mxu0 0
        %662 = vmatpush1.bf16.msra.mxu0 %v629
        %663 = vmatprep.subr.bf16.mxu0 0
        %664 = vmatpush1.bf16.msra.mxu0 %v630
        %665 = vmatprep.subr.bf16.mxu0 0
        %666 = vmatpush1.bf16.msra.mxu0 %v631
        %667 = vmatprep.subr.bf16.mxu0 0
        %668 = vmatpush1.bf16.msra.mxu0 %v632
        %669 = vmatprep.subr.bf16.mxu0 0
        %670 = vmatpush1.bf16.msra.mxu0 %v633
        %671 = vmatprep.subr.bf16.mxu0 0
        %672 = vmatpush1.bf16.msra.mxu0 %v634
        %673 = vmatprep.subr.bf16.mxu0 0
        %674 = vmatpush1.bf16.msra.mxu0 %v635
        %675 = vmatprep.subr.bf16.mxu0 0
        %676 = vmatpush1.bf16.msra.mxu0 %v636
        %677 = vmatprep.subr.bf16.mxu0 0
        %678 = vmatpush1.bf16.msra.mxu0 0
        %679 = vmatprep.subr.bf16.mxu0 0
        %680 = vmatpush1.bf16.msra.mxu0 0
        %681 = vmatprep.subr.bf16.mxu0 0
        %682 = vmatpush1.bf16.msra.mxu0 0
        %683 = vmatprep.subr.bf16.mxu0 0
        %684 = vmatpush1.bf16.msra.mxu0 0
        %685 = vmatprep.mubr.bf16.mxu0 %v651
        %686 = vmatmul.mubr.bf16.gmra.mrb[0].mxu0 %v550
        %v687 = vpop.f32.mrb[0].mxu0
        %v688 = vadd.f32 %v576, %v687
        %v689 = vpop.f32.mrb[0].mxu0
        %v690 = vpop.f32.mrb[0].mxu0
        %v691 = vpop.f32.mrb[0].mxu0
        %692 = vdwg.mxu0
        %v693 = vld [vmem:[%s3] sm:$0x1]
        %v694 = vld [vmem:[%s4] sm:$0x1]
        %vm695 = vcmask 258048
        %v696 = vsel %vm695, %v688, 0.0
        %697 = vadd.xlane.f32.xlu0 %v696
        %v698 = vpop.xlane.xlu0 %697
        %v699 = vrcp.pop 32.0
        %v700 = vmul.f32 %v698, %v699
        %v701 = vsub.f32 %v688, %v700
        %v702 = vmul.f32 %v701, %v701
        %v703 = vsel %vm695, %v702, 0.0
        %704 = vadd.xlane.f32.xlu0 %v703
        %v705 = vpop.xlane.xlu0 %704
        %v706 = vmul.f32 %v705, %v699
        %v707 = vadd.f32 %v706, 1e-05
        %v708 = vrsqrt.pop %v707
        %v709 = vmul.f32 %v701, %v708
        %v711 = vlaneseq
        %v712 = vshrl.u32 %v711, 7
        %v713 = vsub.s32 0, %v712
        %v714 = vrot.slane %v693, %v713
        %v716 = vmul.f32 %v709, %v714
        %v718 = vlaneseq
        %v719 = vshrl.u32 %v718, 7
        %v720 = vsub.s32 0, %v719
        %v721 = vrot.slane %v694, %v720
        %v723 = vadd.f32 %v716, %v721
        loop: start=0, step=1, limit=2
        $region89: #{tpu_custom_call.1} parent=87 // loop_pre_header
          _
        $region90: #{tpu_custom_call.1} parent=87 // loop_header
          %s725 = sphi 0, %s729
          %p726 = scmp.ge.s32.totalorder %s725, 2
          %v730 = vphi %v723, %v1785
        $region91: #{tpu_custom_call.1} parent=87 // loop_header_branch
          %728 = sbr.rel (%p726) target = $region95
        $region92: #{tpu_custom_call.1} parent=87 // loop_body
          %s731 = scalar_lea.vmem %s5, %s725
          %v732 = vld [vmem:[%s731] sm:$0x1]
          %s733 = scalar_lea.vmem %s6, %s725
          %v734 = vld [vmem:[%s733] sm:$0x1]
          %v735 = vsel %vm695, %v730, 0.0
          %736 = vadd.xlane.f32.xlu0 %v735
          %v737 = vpop.xlane.xlu0 %736
          %v738 = vmul.f32 %v737, %v699
          %v739 = vsub.f32 %v730, %v738
          %v740 = vmul.f32 %v739, %v739
          %v741 = vsel %vm695, %v740, 0.0
          %742 = vadd.xlane.f32.xlu0 %v741
          %v743 = vpop.xlane.xlu0 %742
          %v744 = vmul.f32 %v743, %v699
          %v745 = vadd.f32 %v744, 1e-05
          %v746 = vrsqrt.pop %v745
          %v747 = vmul.f32 %v739, %v746
          %v749 = vlaneseq
          %v750 = vshrl.u32 %v749, 7
          %v751 = vsub.s32 0, %v750
          %v752 = vrot.slane %v732, %v751
          %v754 = vmul.f32 %v747, %v752
          %v756 = vlaneseq
          %v757 = vshrl.u32 %v756, 7
          %v758 = vsub.s32 0, %v757
          %v759 = vrot.slane %v734, %v758
          %v761 = vadd.f32 %v754, %v759
          %v762 = vpack.c.bf16 %v761, %v761
          %s763 = smul.u32 %s725, 4
          %s764 = smul.addr %s763, 4
          %s765 = scalar_lea.vmem %s7, %s764
          %v766 = vld [vmem:[%s765] sm:$0xf]
          %v767 = vld [vmem:[%s765 + $0x4] sm:$0xf]
          %v768 = vld [vmem:[%s765 + $0x8] sm:$0xf]
          %v769 = vld [vmem:[%s765 + $0xc] sm:$0xf]
          %s770 = scalar_lea.vmem %s8, %s725
          %v771 = vld [vmem:[%s770] sm:$0x1]
          %v773 = vlaneseq
          %v774 = vshrl.u32 %v773, 7
          %v775 = vsub.s32 0, %v774
          %v776 = vrot.slane %v771, %v775
          %v782 = vunpack.c.l.b16 %v766
          %v783 = vunpack.c.l.b16 %v767
          %v784 = vunpack.c.l.b16 %v768
          %v785 = vunpack.c.l.b16 %v769
          %v786 = vpack.c.b16 %v783, %v782
          %v787 = vpack.c.b16 %v785, %v784
          %vm790 = vcmask 261120
          %v792 = vsel %vm790, %v762, 0
          %794 = vmatprep.subr.bf16.mxu0 0
          %795 = vmatpush1.bf16.msra.mxu0 %v786
          %796 = vmatprep.subr.bf16.mxu0 0
          %797 = vmatpush1.bf16.msra.mxu0 %v787
          %798 = vmatprep.subr.bf16.mxu0 0
          %799 = vmatpush1.bf16.msra.mxu0 0
          %800 = vmatprep.subr.bf16.mxu0 0
          %801 = vmatpush1.bf16.msra.mxu0 0
          %802 = vmatprep.subr.bf16.mxu0 0
          %803 = vmatpush1.bf16.msra.mxu0 0
          %804 = vmatprep.subr.bf16.mxu0 0
          %805 = vmatpush1.bf16.msra.mxu0 0
          %806 = vmatprep.subr.bf16.mxu0 0
          %807 = vmatpush1.bf16.msra.mxu0 0
          %808 = vmatprep.subr.bf16.mxu0 0
          %809 = vmatpush1.bf16.msra.mxu0 0
          %810 = vmatprep.subr.bf16.mxu0 0
          %811 = vmatpush1.bf16.msra.mxu0 0
          %812 = vmatprep.subr.bf16.mxu0 0
          %813 = vmatpush1.bf16.msra.mxu0 0
          %814 = vmatprep.subr.bf16.mxu0 0
          %815 = vmatpush1.bf16.msra.mxu0 0
          %816 = vmatprep.subr.bf16.mxu0 0
          %817 = vmatpush1.bf16.msra.mxu0 0
          %818 = vmatprep.subr.bf16.mxu0 0
          %819 = vmatpush1.bf16.msra.mxu0 0
          %820 = vmatprep.subr.bf16.mxu0 0
          %821 = vmatpush1.bf16.msra.mxu0 0
          %822 = vmatprep.subr.bf16.mxu0 0
          %823 = vmatpush1.bf16.msra.mxu0 0
          %824 = vmatprep.subr.bf16.mxu0 0
          %825 = vmatpush1.bf16.msra.mxu0 0
          %826 = vmatprep.mubr.bf16.mxu0 0
          %827 = vmatmul.mubr.bf16.gmra.mrb[0].mxu0 %v792
          %v828 = vpop.f32.mrb[0].mxu0
          %v829 = vadd.f32 %v776, %v828
          %v830 = vpop.f32.mrb[0].mxu0
          %v831 = vpop.f32.mrb[0].mxu0
          %v832 = vpop.f32.mrb[0].mxu0
          %833 = vdwg.mxu0
          %835 = vrot.lane.b32.xlu0 %v829, 120
          %v836 = vpop.permute.xlu0 %835
          %837 = vrot.lane.b32.xlu0 %v829, 112
          %v838 = vpop.permute.xlu0 %837
          %839 = vrot.lane.b32.xlu0 %v829, 104
          %v840 = vpop.permute.xlu0 %839
          %841 = vrot.lane.b32.xlu0 %v829, 96
          %v842 = vpop.permute.xlu0 %841
          %vm843 = vcmask 64512
          %v844 = vsel %vm843, %v829, 0
          %v846 = vsel %vm843, %v842, 0
          %848 = vmatprep.subr.mxu0 0.0
          %849 = vmatpush1.xpose.msra.mxu0 %v846
          %850 = vmatprep.subr.mxu0 0.0
          %851 = vmatpush1.xpose.msra.mxu0 0.0
          %852 = vmatprep.subr.mxu0 0.0
          %853 = vmatpush1.xpose.msra.mxu0 0.0
          %854 = vmatprep.subr.mxu0 0.0
          %855 = vmatpush1.xpose.msra.mxu0 0.0
          %856 = vmatprep.subr.mxu0 0.0
          %857 = vmatpush1.xpose.msra.mxu0 0.0
          %858 = vmatprep.subr.mxu0 0.0
          %859 = vmatpush1.xpose.msra.mxu0 0.0
          %860 = vmatprep.subr.mxu0 0.0
          %861 = vmatpush1.xpose.msra.mxu0 0.0
          %862 = vmatprep.subr.mxu0 0.0
          %863 = vmatpush1.xpose.msra.mxu0 0.0
          %864 = vmatprep.subr.mxu0 0.0
          %865 = vmatpush1.xpose.msra.mxu0 0.0
          %866 = vmatprep.subr.mxu0 0.0
          %867 = vmatpush1.xpose.msra.mxu0 0.0
          %868 = vmatprep.subr.mxu0 0.0
          %869 = vmatpush1.xpose.msra.mxu0 0.0
          %870 = vmatprep.subr.mxu0 0.0
          %871 = vmatpush1.xpose.msra.mxu0 0.0
          %872 = vmatprep.subr.mxu0 0.0
          %873 = vmatpush1.xpose.msra.mxu0 0.0
          %874 = vmatprep.subr.mxu0 0.0
          %875 = vmatpush1.xpose.msra.mxu0 0.0
          %876 = vmatprep.subr.mxu0 0.0
          %877 = vmatpush1.xpose.msra.mxu0 0.0
          %878 = vmatprep.subr.mxu0 0.0
          %879 = vmatpush1.xpose.msra.mxu0 0.0
          %880 = vmatprep.subr.mxu0 0.0
          %881 = vmatpush1.xpose.msra.mxu0 0.0
          %882 = vmatprep.subr.mxu0 0.0
          %883 = vmatpush1.xpose.msra.mxu0 0.0
          %884 = vmatprep.subr.mxu0 0.0
          %885 = vmatpush1.xpose.msra.mxu0 0.0
          %886 = vmatprep.subr.mxu0 0.0
          %887 = vmatpush1.xpose.msra.mxu0 0.0
          %888 = vmatprep.subr.mxu0 0.0
          %889 = vmatpush1.xpose.msra.mxu0 0.0
          %890 = vmatprep.subr.mxu0 0.0
          %891 = vmatpush1.xpose.msra.mxu0 0.0
          %892 = vmatprep.subr.mxu0 0.0
          %893 = vmatpush1.xpose.msra.mxu0 0.0
          %894 = vmatprep.subr.mxu0 0.0
          %895 = vmatpush1.xpose.msra.mxu0 0.0
          %896 = vmatprep.subr.mxu0 0.0
          %897 = vmatpush1.xpose.msra.mxu0 0.0
          %898 = vmatprep.subr.mxu0 0.0
          %899 = vmatpush1.xpose.msra.mxu0 0.0
          %900 = vmatprep.subr.mxu0 0.0
          %901 = vmatpush1.xpose.msra.mxu0 0.0
          %902 = vmatprep.subr.mxu0 0.0
          %903 = vmatpush1.xpose.msra.mxu0 0.0
          %904 = vmatprep.subr.mxu0 0.0
          %905 = vmatpush1.xpose.msra.mxu0 0.0
          %906 = vmatprep.subr.mxu0 0.0
          %907 = vmatpush1.xpose.msra.mxu0 0.0
          %908 = vmatprep.subr.mxu0 0.0
          %909 = vmatpush1.xpose.msra.mxu0 0.0
          %910 = vmatprep.subr.mxu0 0.0
          %911 = vmatpush1.xpose.msra.mxu0 0.0
          %912 = vmatprep.mubr.f32.mxu0 0.0
          %913 = vmatmul.mubr.f32.gmra.mrb[0].mxu0 %v844
          %v914 = vpop.f32.mrb[0].mxu0
          %v915 = vadd.f32 0.0, %v914
          %v916 = vpop.f32.mrb[0].mxu0
          %917 = vdwg.mxu0
          %918 = vrot.lane.b32.xlu0 %v836, 96
          %v919 = vpop.permute.xlu0 %918
          %v920 = vsel %vm843, %v836, 0
          %v922 = vsel %vm843, %v919, 0
          %924 = vmatprep.subr.mxu0 0.0
          %925 = vmatpush1.xpose.msra.mxu0 %v922
          %926 = vmatprep.subr.mxu0 0.0
          %927 = vmatpush1.xpose.msra.mxu0 0.0
          %928 = vmatprep.subr.mxu0 0.0
          %929 = vmatpush1.xpose.msra.mxu0 0.0
          %930 = vmatprep.subr.mxu0 0.0
          %931 = vmatpush1.xpose.msra.mxu0 0.0
          %932 = vmatprep.subr.mxu0 0.0
          %933 = vmatpush1.xpose.msra.mxu0 0.0
          %934 = vmatprep.subr.mxu0 0.0
          %935 = vmatpush1.xpose.msra.mxu0 0.0
          %936 = vmatprep.subr.mxu0 0.0
          %937 = vmatpush1.xpose.msra.mxu0 0.0
          %938 = vmatprep.subr.mxu0 0.0
          %939 = vmatpush1.xpose.msra.mxu0 0.0
          %940 = vmatprep.subr.mxu0 0.0
          %941 = vmatpush1.xpose.msra.mxu0 0.0
          %942 = vmatprep.subr.mxu0 0.0
          %943 = vmatpush1.xpose.msra.mxu0 0.0
          %944 = vmatprep.subr.mxu0 0.0
          %945 = vmatpush1.xpose.msra.mxu0 0.0
          %946 = vmatprep.subr.mxu0 0.0
          %947 = vmatpush1.xpose.msra.mxu0 0.0
          %948 = vmatprep.subr.mxu0 0.0
          %949 = vmatpush1.xpose.msra.mxu0 0.0
          %950 = vmatprep.subr.mxu0 0.0
          %951 = vmatpush1.xpose.msra.mxu0 0.0
          %952 = vmatprep.subr.mxu0 0.0
          %953 = vmatpush1.xpose.msra.mxu0 0.0
          %954 = vmatprep.subr.mxu0 0.0
          %955 = vmatpush1.xpose.msra.mxu0 0.0
          %956 = vmatprep.subr.mxu0 0.0
          %957 = vmatpush1.xpose.msra.mxu0 0.0
          %958 = vmatprep.subr.mxu0 0.0
          %959 = vmatpush1.xpose.msra.mxu0 0.0
          %960 = vmatprep.subr.mxu0 0.0
          %961 = vmatpush1.xpose.msra.mxu0 0.0
          %962 = vmatprep.subr.mxu0 0.0
          %963 = vmatpush1.xpose.msra.mxu0 0.0
          %964 = vmatprep.subr.mxu0 0.0
          %965 = vmatpush1.xpose.msra.mxu0 0.0
          %966 = vmatprep.subr.mxu0 0.0
          %967 = vmatpush1.xpose.msra.mxu0 0.0
          %968 = vmatprep.subr.mxu0 0.0
          %969 = vmatpush1.xpose.msra.mxu0 0.0
          %970 = vmatprep.subr.mxu0 0.0
          %971 = vmatpush1.xpose.msra.mxu0 0.0
          %972 = vmatprep.subr.mxu0 0.0
          %973 = vmatpush1.xpose.msra.mxu0 0.0
          %974 = vmatprep.subr.mxu0 0.0
          %975 = vmatpush1.xpose.msra.mxu0 0.0
          %976 = vmatprep.subr.mxu0 0.0
          %977 = vmatpush1.xpose.msra.mxu0 0.0
          %978 = vmatprep.subr.mxu0 0.0
          %979 = vmatpush1.xpose.msra.mxu0 0.0
          %980 = vmatprep.subr.mxu0 0.0
          %981 = vmatpush1.xpose.msra.mxu0 0.0
          %982 = vmatprep.subr.mxu0 0.0
          %983 = vmatpush1.xpose.msra.mxu0 0.0
          %984 = vmatprep.subr.mxu0 0.0
          %985 = vmatpush1.xpose.msra.mxu0 0.0
          %986 = vmatprep.subr.mxu0 0.0
          %987 = vmatpush1.xpose.msra.mxu0 0.0
          %988 = vmatprep.mubr.f32.mxu0 0.0
          %989 = vmatmul.mubr.f32.gmra.mrb[0].mxu0 %v920
          %v990 = vpop.f32.mrb[0].mxu0
          %v991 = vadd.f32 0.0, %v990
          %v992 = vpop.f32.mrb[0].mxu0
          %993 = vdwg.mxu0
          %994 = vrot.lane.b32.xlu0 %v838, 96
          %v995 = vpop.permute.xlu0 %994
          %v996 = vsel %vm843, %v838, 0
          %v998 = vsel %vm843, %v995, 0
          %1000 = vmatprep.subr.mxu0 0.0
          %1001 = vmatpush1.xpose.msra.mxu0 %v998
          %1002 = vmatprep.subr.mxu0 0.0
          %1003 = vmatpush1.xpose.msra.mxu0 0.0
          %1004 = vmatprep.subr.mxu0 0.0
          %1005 = vmatpush1.xpose.msra.mxu0 0.0
          %1006 = vmatprep.subr.mxu0 0.0
          %1007 = vmatpush1.xpose.msra.mxu0 0.0
          %1008 = vmatprep.subr.mxu0 0.0
          %1009 = vmatpush1.xpose.msra.mxu0 0.0
          %1010 = vmatprep.subr.mxu0 0.0
          %1011 = vmatpush1.xpose.msra.mxu0 0.0
          %1012 = vmatprep.subr.mxu0 0.0
          %1013 = vmatpush1.xpose.msra.mxu0 0.0
          %1014 = vmatprep.subr.mxu0 0.0
          %1015 = vmatpush1.xpose.msra.mxu0 0.0
          %1016 = vmatprep.subr.mxu0 0.0
          %1017 = vmatpush1.xpose.msra.mxu0 0.0
          %1018 = vmatprep.subr.mxu0 0.0
          %1019 = vmatpush1.xpose.msra.mxu0 0.0
          %1020 = vmatprep.subr.mxu0 0.0
          %1021 = vmatpush1.xpose.msra.mxu0 0.0
          %1022 = vmatprep.subr.mxu0 0.0
          %1023 = vmatpush1.xpose.msra.mxu0 0.0
          %1024 = vmatprep.subr.mxu0 0.0
          %1025 = vmatpush1.xpose.msra.mxu0 0.0
          %1026 = vmatprep.subr.mxu0 0.0
          %1027 = vmatpush1.xpose.msra.mxu0 0.0
          %1028 = vmatprep.subr.mxu0 0.0
          %1029 = vmatpush1.xpose.msra.mxu0 0.0
          %1030 = vmatprep.subr.mxu0 0.0
          %1031 = vmatpush1.xpose.msra.mxu0 0.0
          %1032 = vmatprep.subr.mxu0 0.0
          %1033 = vmatpush1.xpose.msra.mxu0 0.0
          %1034 = vmatprep.subr.mxu0 0.0
          %1035 = vmatpush1.xpose.msra.mxu0 0.0
          %1036 = vmatprep.subr.mxu0 0.0
          %1037 = vmatpush1.xpose.msra.mxu0 0.0
          %1038 = vmatprep.subr.mxu0 0.0
          %1039 = vmatpush1.xpose.msra.mxu0 0.0
          %1040 = vmatprep.subr.mxu0 0.0
          %1041 = vmatpush1.xpose.msra.mxu0 0.0
          %1042 = vmatprep.subr.mxu0 0.0
          %1043 = vmatpush1.xpose.msra.mxu0 0.0
          %1044 = vmatprep.subr.mxu0 0.0
          %1045 = vmatpush1.xpose.msra.mxu0 0.0
          %1046 = vmatprep.subr.mxu0 0.0
          %1047 = vmatpush1.xpose.msra.mxu0 0.0
          %1048 = vmatprep.subr.mxu0 0.0
          %1049 = vmatpush1.xpose.msra.mxu0 0.0
          %1050 = vmatprep.subr.mxu0 0.0
          %1051 = vmatpush1.xpose.msra.mxu0 0.0
          %1052 = vmatprep.subr.mxu0 0.0
          %1053 = vmatpush1.xpose.msra.mxu0 0.0
          %1054 = vmatprep.subr.mxu0 0.0
          %1055 = vmatpush1.xpose.msra.mxu0 0.0
          %1056 = vmatprep.subr.mxu0 0.0
          %1057 = vmatpush1.xpose.msra.mxu0 0.0
          %1058 = vmatprep.subr.mxu0 0.0
          %1059 = vmatpush1.xpose.msra.mxu0 0.0
          %1060 = vmatprep.subr.mxu0 0.0
          %1061 = vmatpush1.xpose.msra.mxu0 0.0
          %1062 = vmatprep.subr.mxu0 0.0
          %1063 = vmatpush1.xpose.msra.mxu0 0.0
          %1064 = vmatprep.mubr.f32.mxu0 0.0
          %1065 = vmatmul.mubr.f32.gmra.mrb[0].mxu0 %v996
          %v1066 = vpop.f32.mrb[0].mxu0
          %v1067 = vadd.f32 0.0, %v1066
          %v1068 = vpop.f32.mrb[0].mxu0
          %1069 = vdwg.mxu0
          %1070 = vrot.lane.b32.xlu0 %v840, 96
          %v1071 = vpop.permute.xlu0 %1070
          %v1072 = vsel %vm843, %v840, 0
          %v1074 = vsel %vm843, %v1071, 0
          %1076 = vmatprep.subr.mxu0 0.0
          %1077 = vmatpush1.xpose.msra.mxu0 %v1074
          %1078 = vmatprep.subr.mxu0 0.0
          %1079 = vmatpush1.xpose.msra.mxu0 0.0
          %1080 = vmatprep.subr.mxu0 0.0
          %1081 = vmatpush1.xpose.msra.mxu0 0.0
          %1082 = vmatprep.subr.mxu0 0.0
          %1083 = vmatpush1.xpose.msra.mxu0 0.0
          %1084 = vmatprep.subr.mxu0 0.0
          %1085 = vmatpush1.xpose.msra.mxu0 0.0
          %1086 = vmatprep.subr.mxu0 0.0
          %1087 = vmatpush1.xpose.msra.mxu0 0.0
          %1088 = vmatprep.subr.mxu0 0.0
          %1089 = vmatpush1.xpose.msra.mxu0 0.0
          %1090 = vmatprep.subr.mxu0 0.0
          %1091 = vmatpush1.xpose.msra.mxu0 0.0
          %1092 = vmatprep.subr.mxu0 0.0
          %1093 = vmatpush1.xpose.msra.mxu0 0.0
          %1094 = vmatprep.subr.mxu0 0.0
          %1095 = vmatpush1.xpose.msra.mxu0 0.0
          %1096 = vmatprep.subr.mxu0 0.0
          %1097 = vmatpush1.xpose.msra.mxu0 0.0
          %1098 = vmatprep.subr.mxu0 0.0
          %1099 = vmatpush1.xpose.msra.mxu0 0.0
          %1100 = vmatprep.subr.mxu0 0.0
          %1101 = vmatpush1.xpose.msra.mxu0 0.0
          %1102 = vmatprep.subr.mxu0 0.0
          %1103 = vmatpush1.xpose.msra.mxu0 0.0
          %1104 = vmatprep.subr.mxu0 0.0
          %1105 = vmatpush1.xpose.msra.mxu0 0.0
          %1106 = vmatprep.subr.mxu0 0.0
          %1107 = vmatpush1.xpose.msra.mxu0 0.0
          %1108 = vmatprep.subr.mxu0 0.0
          %1109 = vmatpush1.xpose.msra.mxu0 0.0
          %1110 = vmatprep.subr.mxu0 0.0
          %1111 = vmatpush1.xpose.msra.mxu0 0.0
          %1112 = vmatprep.subr.mxu0 0.0
          %1113 = vmatpush1.xpose.msra.mxu0 0.0
          %1114 = vmatprep.subr.mxu0 0.0
          %1115 = vmatpush1.xpose.msra.mxu0 0.0
          %1116 = vmatprep.subr.mxu0 0.0
          %1117 = vmatpush1.xpose.msra.mxu0 0.0
          %1118 = vmatprep.subr.mxu0 0.0
          %1119 = vmatpush1.xpose.msra.mxu0 0.0
          %1120 = vmatprep.subr.mxu0 0.0
          %1121 = vmatpush1.xpose.msra.mxu0 0.0
          %1122 = vmatprep.subr.mxu0 0.0
          %1123 = vmatpush1.xpose.msra.mxu0 0.0
          %1124 = vmatprep.subr.mxu0 0.0
          %1125 = vmatpush1.xpose.msra.mxu0 0.0
          %1126 = vmatprep.subr.mxu0 0.0
          %1127 = vmatpush1.xpose.msra.mxu0 0.0
          %1128 = vmatprep.subr.mxu0 0.0
          %1129 = vmatpush1.xpose.msra.mxu0 0.0
          %1130 = vmatprep.subr.mxu0 0.0
          %1131 = vmatpush1.xpose.msra.mxu0 0.0
          %1132 = vmatprep.subr.mxu0 0.0
          %1133 = vmatpush1.xpose.msra.mxu0 0.0
          %1134 = vmatprep.subr.mxu0 0.0
          %1135 = vmatpush1.xpose.msra.mxu0 0.0
          %1136 = vmatprep.subr.mxu0 0.0
          %1137 = vmatpush1.xpose.msra.mxu0 0.0
          %1138 = vmatprep.subr.mxu0 0.0
          %1139 = vmatpush1.xpose.msra.mxu0 0.0
          %1140 = vmatprep.mubr.f32.mxu0 0.0
          %1141 = vmatmul.mubr.f32.gmra.mrb[0].mxu0 %v1072
          %v1142 = vpop.f32.mrb[0].mxu0
          %v1143 = vadd.f32 0.0, %v1142
          %v1144 = vpop.f32.mrb[0].mxu0
          %1145 = vdwg.mxu0
          %vm1146 = vcmask 36864
          %v1147 = vsel %vm1146, %v915, -inf
          %1148 = vmax.xlane.f32.xlu0 %v1147
          %v1149 = vpop.xlane.xlu0 %1148
          %v1150 = vsel %vm1146, %v991, -inf
          %1151 = vmax.xlane.f32.xlu0 %v1150
          %v1152 = vpop.xlane.xlu0 %1151
          %v1153 = vsel %vm1146, %v1067, -inf
          %1154 = vmax.xlane.f32.xlu0 %v1153
          %v1155 = vpop.xlane.xlu0 %1154
          %v1156 = vsel %vm1146, %v1143, -inf
          %1157 = vmax.xlane.f32.xlu0 %v1156
          %v1158 = vpop.xlane.xlu0 %1157
          %v1159 = vsub.f32 %v915, %v1149
          %v1160 = vsub.f32 %v991, %v1152
          %v1161 = vsub.f32 %v1067, %v1155
          %v1162 = vsub.f32 %v1143, %v1158
          %v1163 = vmul.f32 %v1159, 1.442695
          %v1164 = vpow.pop %v1163
          %v1165 = vmul.f32 %v1160, 1.442695
          %v1166 = vpow.pop %v1165
          %v1167 = vmul.f32 %v1161, 1.442695
          %v1168 = vpow.pop %v1167
          %v1169 = vmul.f32 %v1162, 1.442695
          %v1170 = vpow.pop %v1169
          %v1171 = vsel %vm1146, %v1164, 0.0
          %1172 = vadd.xlane.f32.xlu0 %v1171
          %v1173 = vpop.xlane.xlu0 %1172
          %v1174 = vsel %vm1146, %v1166, 0.0
          %1175 = vadd.xlane.f32.xlu0 %v1174
          %v1176 = vpop.xlane.xlu0 %1175
          %v1177 = vsel %vm1146, %v1168, 0.0
          %1178 = vadd.xlane.f32.xlu0 %v1177
          %v1179 = vpop.xlane.xlu0 %1178
          %v1180 = vsel %vm1146, %v1170, 0.0
          %1181 = vadd.xlane.f32.xlu0 %v1180
          %v1182 = vpop.xlane.xlu0 %1181
          %v1183 = vrcp.pop %v1173
          %v1184 = vrcp.pop %v1176
          %v1185 = vrcp.pop %v1179
          %v1186 = vrcp.pop %v1182
          %v1187 = vmul.f32 %v1164, %v1183
          %v1188 = vmul.f32 %v1166, %v1184
          %v1189 = vmul.f32 %v1168, %v1185
          %v1190 = vmul.f32 %v1170, %v1186
          %1191 = vrot.lane.b32.xlu0 %v829, 64
          %v1192 = vpop.permute.xlu0 %1191
          %vm1193 = vcmask 39936
          %v1195 = vsel %vm1193, %v1187, 0
          %vm1197 = vcmask 1044480
          %v1198 = vsel %vm1197, %v1192, 0
          %1200 = vmatprep.subr.mxu0 0.0
          %1201 = vmatpush1.msra.mxu0 %v1198
          %1202 = vmatprep.subr.mxu0 0.0
          %1203 = vmatpush1.msra.mxu0 0.0
          %1204 = vmatprep.subr.mxu0 0.0
          %1205 = vmatpush1.msra.mxu0 0.0
          %1206 = vmatprep.subr.mxu0 0.0
          %1207 = vmatpush1.msra.mxu0 0.0
          %1208 = vmatprep.subr.mxu0 0.0
          %1209 = vmatpush1.msra.mxu0 0.0
          %1210 = vmatprep.subr.mxu0 0.0
          %1211 = vmatpush1.msra.mxu0 0.0
          %1212 = vmatprep.subr.mxu0 0.0
          %1213 = vmatpush1.msra.mxu0 0.0
          %1214 = vmatprep.subr.mxu0 0.0
          %1215 = vmatpush1.msra.mxu0 0.0
          %1216 = vmatprep.subr.mxu0 0.0
          %1217 = vmatpush1.msra.mxu0 0.0
          %1218 = vmatprep.subr.mxu0 0.0
          %1219 = vmatpush1.msra.mxu0 0.0
          %1220 = vmatprep.subr.mxu0 0.0
          %1221 = vmatpush1.msra.mxu0 0.0
          %1222 = vmatprep.subr.mxu0 0.0
          %1223 = vmatpush1.msra.mxu0 0.0
          %1224 = vmatprep.subr.mxu0 0.0
          %1225 = vmatpush1.msra.mxu0 0.0
          %1226 = vmatprep.subr.mxu0 0.0
          %1227 = vmatpush1.msra.mxu0 0.0
          %1228 = vmatprep.subr.mxu0 0.0
          %1229 = vmatpush1.msra.mxu0 0.0
          %1230 = vmatprep.subr.mxu0 0.0
          %1231 = vmatpush1.msra.mxu0 0.0
          %1232 = vmatprep.subr.mxu0 0.0
          %1233 = vmatpush1.msra.mxu0 0.0
          %1234 = vmatprep.subr.mxu0 0.0
          %1235 = vmatpush1.msra.mxu0 0.0
          %1236 = vmatprep.subr.mxu0 0.0
          %1237 = vmatpush1.msra.mxu0 0.0
          %1238 = vmatprep.subr.mxu0 0.0
          %1239 = vmatpush1.msra.mxu0 0.0
          %1240 = vmatprep.subr.mxu0 0.0
          %1241 = vmatpush1.msra.mxu0 0.0
          %1242 = vmatprep.subr.mxu0 0.0
          %1243 = vmatpush1.msra.mxu0 0.0
          %1244 = vmatprep.subr.mxu0 0.0
          %1245 = vmatpush1.msra.mxu0 0.0
          %1246 = vmatprep.subr.mxu0 0.0
          %1247 = vmatpush1.msra.mxu0 0.0
          %1248 = vmatprep.subr.mxu0 0.0
          %1249 = vmatpush1.msra.mxu0 0.0
          %1250 = vmatprep.subr.mxu0 0.0
          %1251 = vmatpush1.msra.mxu0 0.0
          %1252 = vmatprep.subr.mxu0 0.0
          %1253 = vmatpush1.msra.mxu0 0.0
          %1254 = vmatprep.subr.mxu0 0.0
          %1255 = vmatpush1.msra.mxu0 0.0
          %1256 = vmatprep.subr.mxu0 0.0
          %1257 = vmatpush1.msra.mxu0 0.0
          %1258 = vmatprep.subr.mxu0 0.0
          %1259 = vmatpush1.msra.mxu0 0.0
          %1260 = vmatprep.subr.mxu0 0.0
          %1261 = vmatpush1.msra.mxu0 0.0
          %1262 = vmatprep.subr.mxu0 0.0
          %1263 = vmatpush1.msra.mxu0 0.0
          %1264 = vmatprep.mubr.f32.mxu0 0.0
          %1265 = vmatmul.mubr.f32.gmra.mrb[0].mxu0 %v1195
          %v1266 = vpop.f32.mrb[0].mxu0
          %v1267 = vadd.f32 0.0, %v1266
          %v1268 = vpop.f32.mrb[0].mxu0
          %1269 = vdwg.mxu0
          %1270 = vrot.lane.b32.xlu0 %v836, 64
          %v1271 = vpop.permute.xlu0 %1270
          %v1273 = vsel %vm1193, %v1188, 0
          %v1275 = vsel %vm1197, %v1271, 0
          %1277 = vmatprep.subr.mxu0 0.0
          %1278 = vmatpush1.msra.mxu0 %v1275
          %1279 = vmatprep.subr.mxu0 0.0
          %1280 = vmatpush1.msra.mxu0 0.0
          %1281 = vmatprep.subr.mxu0 0.0
          %1282 = vmatpush1.msra.mxu0 0.0
          %1283 = vmatprep.subr.mxu0 0.0
          %1284 = vmatpush1.msra.mxu0 0.0
          %1285 = vmatprep.subr.mxu0 0.0
          %1286 = vmatpush1.msra.mxu0 0.0
          %1287 = vmatprep.subr.mxu0 0.0
          %1288 = vmatpush1.msra.mxu0 0.0
          %1289 = vmatprep.subr.mxu0 0.0
          %1290 = vmatpush1.msra.mxu0 0.0
          %1291 = vmatprep.subr.mxu0 0.0
          %1292 = vmatpush1.msra.mxu0 0.0
          %1293 = vmatprep.subr.mxu0 0.0
          %1294 = vmatpush1.msra.mxu0 0.0
          %1295 = vmatprep.subr.mxu0 0.0
          %1296 = vmatpush1.msra.mxu0 0.0
          %1297 = vmatprep.subr.mxu0 0.0
          %1298 = vmatpush1.msra.mxu0 0.0
          %1299 = vmatprep.subr.mxu0 0.0
          %1300 = vmatpush1.msra.mxu0 0.0
          %1301 = vmatprep.subr.mxu0 0.0
          %1302 = vmatpush1.msra.mxu0 0.0
          %1303 = vmatprep.subr.mxu0 0.0
          %1304 = vmatpush1.msra.mxu0 0.0
          %1305 = vmatprep.subr.mxu0 0.0
          %1306 = vmatpush1.msra.mxu0 0.0
          %1307 = vmatprep.subr.mxu0 0.0
          %1308 = vmatpush1.msra.mxu0 0.0
          %1309 = vmatprep.subr.mxu0 0.0
          %1310 = vmatpush1.msra.mxu0 0.0
          %1311 = vmatprep.subr.mxu0 0.0
          %1312 = vmatpush1.msra.mxu0 0.0
          %1313 = vmatprep.subr.mxu0 0.0
          %1314 = vmatpush1.msra.mxu0 0.0
          %1315 = vmatprep.subr.mxu0 0.0
          %1316 = vmatpush1.msra.mxu0 0.0
          %1317 = vmatprep.subr.mxu0 0.0
          %1318 = vmatpush1.msra.mxu0 0.0
          %1319 = vmatprep.subr.mxu0 0.0
          %1320 = vmatpush1.msra.mxu0 0.0
          %1321 = vmatprep.subr.mxu0 0.0
          %1322 = vmatpush1.msra.mxu0 0.0
          %1323 = vmatprep.subr.mxu0 0.0
          %1324 = vmatpush1.msra.mxu0 0.0
          %1325 = vmatprep.subr.mxu0 0.0
          %1326 = vmatpush1.msra.mxu0 0.0
          %1327 = vmatprep.subr.mxu0 0.0
          %1328 = vmatpush1.msra.mxu0 0.0
          %1329 = vmatprep.subr.mxu0 0.0
          %1330 = vmatpush1.msra.mxu0 0.0
          %1331 = vmatprep.subr.mxu0 0.0
          %1332 = vmatpush1.msra.mxu0 0.0
          %1333 = vmatprep.subr.mxu0 0.0
          %1334 = vmatpush1.msra.mxu0 0.0
          %1335 = vmatprep.subr.mxu0 0.0
          %1336 = vmatpush1.msra.mxu0 0.0
          %1337 = vmatprep.subr.mxu0 0.0
          %1338 = vmatpush1.msra.mxu0 0.0
          %1339 = vmatprep.subr.mxu0 0.0
          %1340 = vmatpush1.msra.mxu0 0.0
          %1341 = vmatprep.mubr.f32.mxu0 0.0
          %1342 = vmatmul.mubr.f32.gmra.mrb[0].mxu0 %v1273
          %v1343 = vpop.f32.mrb[0].mxu0
          %v1344 = vadd.f32 0.0, %v1343
          %v1345 = vpop.f32.mrb[0].mxu0
          %1346 = vdwg.mxu0
          %1347 = vrot.lane.b32.xlu0 %v838, 64
          %v1348 = vpop.permute.xlu0 %1347
          %v1350 = vsel %vm1193, %v1189, 0
          %v1352 = vsel %vm1197, %v1348, 0
          %1354 = vmatprep.subr.mxu0 0.0
          %1355 = vmatpush1.msra.mxu0 %v1352
          %1356 = vmatprep.subr.mxu0 0.0
          %1357 = vmatpush1.msra.mxu0 0.0
          %1358 = vmatprep.subr.mxu0 0.0
          %1359 = vmatpush1.msra.mxu0 0.0
          %1360 = vmatprep.subr.mxu0 0.0
          %1361 = vmatpush1.msra.mxu0 0.0
          %1362 = vmatprep.subr.mxu0 0.0
          %1363 = vmatpush1.msra.mxu0 0.0
          %1364 = vmatprep.subr.mxu0 0.0
          %1365 = vmatpush1.msra.mxu0 0.0
          %1366 = vmatprep.subr.mxu0 0.0
          %1367 = vmatpush1.msra.mxu0 0.0
          %1368 = vmatprep.subr.mxu0 0.0
          %1369 = vmatpush1.msra.mxu0 0.0
          %1370 = vmatprep.subr.mxu0 0.0
          %1371 = vmatpush1.msra.mxu0 0.0
          %1372 = vmatprep.subr.mxu0 0.0
          %1373 = vmatpush1.msra.mxu0 0.0
          %1374 = vmatprep.subr.mxu0 0.0
          %1375 = vmatpush1.msra.mxu0 0.0
          %1376 = vmatprep.subr.mxu0 0.0
          %1377 = vmatpush1.msra.mxu0 0.0
          %1378 = vmatprep.subr.mxu0 0.0
          %1379 = vmatpush1.msra.mxu0 0.0
          %1380 = vmatprep.subr.mxu0 0.0
          %1381 = vmatpush1.msra.mxu0 0.0
          %1382 = vmatprep.subr.mxu0 0.0
          %1383 = vmatpush1.msra.mxu0 0.0
          %1384 = vmatprep.subr.mxu0 0.0
          %1385 = vmatpush1.msra.mxu0 0.0
          %1386 = vmatprep.subr.mxu0 0.0
          %1387 = vmatpush1.msra.mxu0 0.0
          %1388 = vmatprep.subr.mxu0 0.0
          %1389 = vmatpush1.msra.mxu0 0.0
          %1390 = vmatprep.subr.mxu0 0.0
          %1391 = vmatpush1.msra.mxu0 0.0
          %1392 = vmatprep.subr.mxu0 0.0
          %1393 = vmatpush1.msra.mxu0 0.0
          %1394 = vmatprep.subr.mxu0 0.0
          %1395 = vmatpush1.msra.mxu0 0.0
          %1396 = vmatprep.subr.mxu0 0.0
          %1397 = vmatpush1.msra.mxu0 0.0
          %1398 = vmatprep.subr.mxu0 0.0
          %1399 = vmatpush1.msra.mxu0 0.0
          %1400 = vmatprep.subr.mxu0 0.0
          %1401 = vmatpush1.msra.mxu0 0.0
          %1402 = vmatprep.subr.mxu0 0.0
          %1403 = vmatpush1.msra.mxu0 0.0
          %1404 = vmatprep.subr.mxu0 0.0
          %1405 = vmatpush1.msra.mxu0 0.0
          %1406 = vmatprep.subr.mxu0 0.0
          %1407 = vmatpush1.msra.mxu0 0.0
          %1408 = vmatprep.subr.mxu0 0.0
          %1409 = vmatpush1.msra.mxu0 0.0
          %1410 = vmatprep.subr.mxu0 0.0
          %1411 = vmatpush1.msra.mxu0 0.0
          %1412 = vmatprep.subr.mxu0 0.0
          %1413 = vmatpush1.msra.mxu0 0.0
          %1414 = vmatprep.subr.mxu0 0.0
          %1415 = vmatpush1.msra.mxu0 0.0
          %1416 = vmatprep.subr.mxu0 0.0
          %1417 = vmatpush1.msra.mxu0 0.0
          %1418 = vmatprep.mubr.f32.mxu0 0.0
          %1419 = vmatmul.mubr.f32.gmra.mrb[0].mxu0 %v1350
          %v1420 = vpop.f32.mrb[0].mxu0
          %v1421 = vadd.f32 0.0, %v1420
          %v1422 = vpop.f32.mrb[0].mxu0
          %1423 = vdwg.mxu0
          %1424 = vrot.lane.b32.xlu0 %v840, 64
          %v1425 = vpop.permute.xlu0 %1424
          %v1427 = vsel %vm1193, %v1190, 0
          %v1429 = vsel %vm1197, %v1425, 0
          %1431 = vmatprep.subr.mxu0 0.0
          %1432 = vmatpush1.msra.mxu0 %v1429
          %1433 = vmatprep.subr.mxu0 0.0
          %1434 = vmatpush1.msra.mxu0 0.0
          %1435 = vmatprep.subr.mxu0 0.0
          %1436 = vmatpush1.msra.mxu0 0.0
          %1437 = vmatprep.subr.mxu0 0.0
          %1438 = vmatpush1.msra.mxu0 0.0
          %1439 = vmatprep.subr.mxu0 0.0
          %1440 = vmatpush1.msra.mxu0 0.0
          %1441 = vmatprep.subr.mxu0 0.0
          %1442 = vmatpush1.msra.mxu0 0.0
          %1443 = vmatprep.subr.mxu0 0.0
          %1444 = vmatpush1.msra.mxu0 0.0
          %1445 = vmatprep.subr.mxu0 0.0
          %1446 = vmatpush1.msra.mxu0 0.0
          %1447 = vmatprep.subr.mxu0 0.0
          %1448 = vmatpush1.msra.mxu0 0.0
          %1449 = vmatprep.subr.mxu0 0.0
          %1450 = vmatpush1.msra.mxu0 0.0
          %1451 = vmatprep.subr.mxu0 0.0
          %1452 = vmatpush1.msra.mxu0 0.0
          %1453 = vmatprep.subr.mxu0 0.0
          %1454 = vmatpush1.msra.mxu0 0.0
          %1455 = vmatprep.subr.mxu0 0.0
          %1456 = vmatpush1.msra.mxu0 0.0
          %1457 = vmatprep.subr.mxu0 0.0
          %1458 = vmatpush1.msra.mxu0 0.0
          %1459 = vmatprep.subr.mxu0 0.0
          %1460 = vmatpush1.msra.mxu0 0.0
          %1461 = vmatprep.subr.mxu0 0.0
          %1462 = vmatpush1.msra.mxu0 0.0
          %1463 = vmatprep.subr.mxu0 0.0
          %1464 = vmatpush1.msra.mxu0 0.0
          %1465 = vmatprep.subr.mxu0 0.0
          %1466 = vmatpush1.msra.mxu0 0.0
          %1467 = vmatprep.subr.mxu0 0.0
          %1468 = vmatpush1.msra.mxu0 0.0
          %1469 = vmatprep.subr.mxu0 0.0
          %1470 = vmatpush1.msra.mxu0 0.0
          %1471 = vmatprep.subr.mxu0 0.0
          %1472 = vmatpush1.msra.mxu0 0.0
          %1473 = vmatprep.subr.mxu0 0.0
          %1474 = vmatpush1.msra.mxu0 0.0
          %1475 = vmatprep.subr.mxu0 0.0
          %1476 = vmatpush1.msra.mxu0 0.0
          %1477 = vmatprep.subr.mxu0 0.0
          %1478 = vmatpush1.msra.mxu0 0.0
          %1479 = vmatprep.subr.mxu0 0.0
          %1480 = vmatpush1.msra.mxu0 0.0
          %1481 = vmatprep.subr.mxu0 0.0
          %1482 = vmatpush1.msra.mxu0 0.0
          %1483 = vmatprep.subr.mxu0 0.0
          %1484 = vmatpush1.msra.mxu0 0.0
          %1485 = vmatprep.subr.mxu0 0.0
          %1486 = vmatpush1.msra.mxu0 0.0
          %1487 = vmatprep.subr.mxu0 0.0
          %1488 = vmatpush1.msra.mxu0 0.0
          %1489 = vmatprep.subr.mxu0 0.0
          %1490 = vmatpush1.msra.mxu0 0.0
          %1491 = vmatprep.subr.mxu0 0.0
          %1492 = vmatpush1.msra.mxu0 0.0
          %1493 = vmatprep.subr.mxu0 0.0
          %1494 = vmatpush1.msra.mxu0 0.0
          %1495 = vmatprep.mubr.f32.mxu0 0.0
          %1496 = vmatmul.mubr.f32.gmra.mrb[0].mxu0 %v1427
          %v1497 = vpop.f32.mrb[0].mxu0
          %v1498 = vadd.f32 0.0, %v1497
          %v1499 = vpop.f32.mrb[0].mxu0
          %1500 = vdwg.mxu0
          %1502 = vrot.lane.b32.xlu0 %v1344, 8
          %v1503 = vpop.permute.xlu0 %1502
          %1506 = vrot.lane.b32.xlu0 %v1421, 16
          %v1507 = vpop.permute.xlu0 %1506
          %1510 = vrot.lane.b32.xlu0 %v1498, 24
          %v1511 = vpop.permute.xlu0 %1510
          %v1513 = vsel %vm843, %v1267, %v1503
          %vm1514 = vcmask 130048
          %v1515 = vsel %vm1514, %v1513, %v1507
          %vm1516 = vcmask 195584
          %v1517 = vsel %vm1516, %v1515, %v1511
          %v1518 = vpack.c.bf16 %v1517, %v1517
          %s1519 = smul.addr %s763, 4
          %s1520 = scalar_lea.vmem %s9, %s1519
          %v1521 = vld [vmem:[%s1520] sm:$0xf]
          %v1522 = vld [vmem:[%s1520 + $0x4] sm:$0xf]
          %v1523 = vld [vmem:[%s1520 + $0x8] sm:$0xf]
          %v1524 = vld [vmem:[%s1520 + $0xc] sm:$0xf]
          %s1525 = scalar_lea.vmem %s10, %s725
          %v1526 = vld [vmem:[%s1525] sm:$0x1]
          %v1528 = vlaneseq
          %v1529 = vshrl.u32 %v1528, 7
          %v1530 = vsub.s32 0, %v1529
          %v1531 = vrot.slane %v1526, %v1530
          %v1537 = vunpack.c.l.b16 %v1521
          %v1538 = vunpack.c.l.b16 %v1522
          %v1539 = vunpack.c.l.b16 %v1523
          %v1540 = vunpack.c.l.b16 %v1524
          %v1541 = vpack.c.b16 %v1538, %v1537
          %v1542 = vpack.c.b16 %v1540, %v1539
          %v1546 = vsel %vm790, %v1518, 0
          %1548 = vmatprep.subr.bf16.mxu0 0
          %1549 = vmatpush1.bf16.msra.mxu0 %v1541
          %1550 = vmatprep.subr.bf16.mxu0 0
          %1551 = vmatpush1.bf16.msra.mxu0 %v1542
          %1552 = vmatprep.subr.bf16.mxu0 0
          %1553 = vmatpush1.bf16.msra.mxu0 0
          %1554 = vmatprep.subr.bf16.mxu0 0
          %1555 = vmatpush1.bf16.msra.mxu0 0
          %1556 = vmatprep.subr.bf16.mxu0 0
          %1557 = vmatpush1.bf16.msra.mxu0 0
          %1558 = vmatprep.subr.bf16.mxu0 0
          %1559 = vmatpush1.bf16.msra.mxu0 0
          %1560 = vmatprep.subr.bf16.mxu0 0
          %1561 = vmatpush1.bf16.msra.mxu0 0
          %1562 = vmatprep.subr.bf16.mxu0 0
          %1563 = vmatpush1.bf16.msra.mxu0 0
          %1564 = vmatprep.subr.bf16.mxu0 0
          %1565 = vmatpush1.bf16.msra.mxu0 0
          %1566 = vmatprep.subr.bf16.mxu0 0
          %1567 = vmatpush1.bf16.msra.mxu0 0
          %1568 = vmatprep.subr.bf16.mxu0 0
          %1569 = vmatpush1.bf16.msra.mxu0 0
          %1570 = vmatprep.subr.bf16.mxu0 0
          %1571 = vmatpush1.bf16.msra.mxu0 0
          %1572 = vmatprep.subr.bf16.mxu0 0
          %1573 = vmatpush1.bf16.msra.mxu0 0
          %1574 = vmatprep.subr.bf16.mxu0 0
          %1575 = vmatpush1.bf16.msra.mxu0 0
          %1576 = vmatprep.subr.bf16.mxu0 0
          %1577 = vmatpush1.bf16.msra.mxu0 0
          %1578 = vmatprep.subr.bf16.mxu0 0
          %1579 = vmatpush1.bf16.msra.mxu0 0
          %1580 = vmatprep.mubr.bf16.mxu0 0
          %1581 = vmatmul.mubr.bf16.gmra.mrb[0].mxu0 %v1546
          %v1582 = vpop.f32.mrb[0].mxu0
          %v1583 = vadd.f32 %v1531, %v1582
          %v1584 = vpop.f32.mrb[0].mxu0
          %v1585 = vpop.f32.mrb[0].mxu0
          %v1586 = vpop.f32.mrb[0].mxu0
          %1587 = vdwg.mxu0
          %v1588 = vadd.f32 %v730, %v1583
          %s1589 = scalar_lea.vmem %s11, %s725
          %v1590 = vld [vmem:[%s1589] sm:$0x1]
          %s1591 = scalar_lea.vmem %s12, %s725
          %v1592 = vld [vmem:[%s1591] sm:$0x1]
          %v1593 = vsel %vm695, %v1588, 0.0
          %1594 = vadd.xlane.f32.xlu0 %v1593
          %v1595 = vpop.xlane.xlu0 %1594
          %v1596 = vmul.f32 %v1595, %v699
          %v1597 = vsub.f32 %v1588, %v1596
          %v1598 = vmul.f32 %v1597, %v1597
          %v1599 = vsel %vm695, %v1598, 0.0
          %1600 = vadd.xlane.f32.xlu0 %v1599
          %v1601 = vpop.xlane.xlu0 %1600
          %v1602 = vmul.f32 %v1601, %v699
          %v1603 = vadd.f32 %v1602, 1e-05
          %v1604 = vrsqrt.pop %v1603
          %v1605 = vmul.f32 %v1597, %v1604
          %v1607 = vlaneseq
          %v1608 = vshrl.u32 %v1607, 7
          %v1609 = vsub.s32 0, %v1608
          %v1610 = vrot.slane %v1590, %v1609
          %v1612 = vmul.f32 %v1605, %v1610
          %v1614 = vlaneseq
          %v1615 = vshrl.u32 %v1614, 7
          %v1616 = vsub.s32 0, %v1615
          %v1617 = vrot.slane %v1592, %v1616
          %v1619 = vadd.f32 %v1612, %v1617
          %v1620 = vpack.c.bf16 %v1619, %v1619
          %s1621 = smul.addr %s763, 4
          %s1622 = scalar_lea.vmem %s13, %s1621
          %v1623 = vld [vmem:[%s1622] sm:$0xf]
          %v1624 = vld [vmem:[%s1622 + $0x4] sm:$0xf]
          %v1625 = vld [vmem:[%s1622 + $0x8] sm:$0xf]
          %v1626 = vld [vmem:[%s1622 + $0xc] sm:$0xf]
          %s1627 = scalar_lea.vmem %s14, %s725
          %v1628 = vld [vmem:[%s1627] sm:$0x1]
          %v1630 = vlaneseq
          %v1631 = vshrl.u32 %v1630, 7
          %v1632 = vsub.s32 0, %v1631
          %v1633 = vrot.slane %v1628, %v1632
          %v1639 = vunpack.c.l.b16 %v1623
          %v1640 = vunpack.c.l.b16 %v1624
          %v1641 = vunpack.c.l.b16 %v1625
          %v1642 = vunpack.c.l.b16 %v1626
          %v1643 = vpack.c.b16 %v1640, %v1639
          %v1644 = vpack.c.b16 %v1642, %v1641
          %v1648 = vsel %vm790, %v1620, 0
          %1650 = vmatprep.subr.bf16.mxu0 0
          %1651 = vmatpush1.bf16.msra.mxu0 %v1643
          %1652 = vmatprep.subr.bf16.mxu0 0
          %1653 = vmatpush1.bf16.msra.mxu0 %v1644
          %1654 = vmatprep.subr.bf16.mxu0 0
          %1655 = vmatpush1.bf16.msra.mxu0 0
          %1656 = vmatprep.subr.bf16.mxu0 0
          %1657 = vmatpush1.bf16.msra.mxu0 0
          %1658 = vmatprep.subr.bf16.mxu0 0
          %1659 = vmatpush1.bf16.msra.mxu0 0
          %1660 = vmatprep.subr.bf16.mxu0 0
          %1661 = vmatpush1.bf16.msra.mxu0 0
          %1662 = vmatprep.subr.bf16.mxu0 0
          %1663 = vmatpush1.bf16.msra.mxu0 0
          %1664 = vmatprep.subr.bf16.mxu0 0
          %1665 = vmatpush1.bf16.msra.mxu0 0
          %1666 = vmatprep.subr.bf16.mxu0 0
          %1667 = vmatpush1.bf16.msra.mxu0 0
          %1668 = vmatprep.subr.bf16.mxu0 0
          %1669 = vmatpush1.bf16.msra.mxu0 0
          %1670 = vmatprep.subr.bf16.mxu0 0
          %1671 = vmatpush1.bf16.msra.mxu0 0
          %1672 = vmatprep.subr.bf16.mxu0 0
          %1673 = vmatpush1.bf16.msra.mxu0 0
          %1674 = vmatprep.subr.bf16.mxu0 0
          %1675 = vmatpush1.bf16.msra.mxu0 0
          %1676 = vmatprep.subr.bf16.mxu0 0
          %1677 = vmatpush1.bf16.msra.mxu0 0
          %1678 = vmatprep.subr.bf16.mxu0 0
          %1679 = vmatpush1.bf16.msra.mxu0 0
          %1680 = vmatprep.subr.bf16.mxu0 0
          %1681 = vmatpush1.bf16.msra.mxu0 0
          %1682 = vmatprep.mubr.bf16.mxu0 0
          %1683 = vmatmul.mubr.bf16.gmra.mrb[0].mxu0 %v1648
          %v1684 = vpop.f32.mrb[0].mxu0
          %v1685 = vadd.f32 %v1633, %v1684
          %v1686 = vpop.f32.mrb[0].mxu0
          %v1687 = vpop.f32.mrb[0].mxu0
          %v1688 = vpop.f32.mrb[0].mxu0
          %1689 = vdwg.mxu0
          %v1690 = vmul.f32 %v1685, 1.702
          %v1691 = vxor.u32 %v1690, 2147483648
          %v1692 = vmul.f32 %v1691, 1.442695
          %v1693 = vpow.pop %v1692
          %v1694 = vadd.f32 %v1693, 1.0
          %v1695 = vrcp.pop %v1694
          %v1696 = vmul.f32 1.0, %v1695
          %v1697 = vmul.f32 %v1685, %v1696
          %v1698 = vpack.c.bf16 %v1697, %v1697
          %s1699 = smul.u32 %s725, 8
          %s1700 = smul.addr %s1699, 4
          %s1701 = scalar_lea.vmem %s15, %s1700
          %v1702 = vld [vmem:[%s1701] sm:$0xf]
          %v1703 = vld [vmem:[%s1701 + $0x4] sm:$0xf]
          %v1704 = vld [vmem:[%s1701 + $0x8] sm:$0xf]
          %v1705 = vld [vmem:[%s1701 + $0xc] sm:$0xf]
          %v1706 = vld [vmem:[%s1701 + $0x10] sm:$0xf]
          %v1707 = vld [vmem:[%s1701 + $0x14] sm:$0xf]
          %v1708 = vld [vmem:[%s1701 + $0x18] sm:$0xf]
          %v1709 = vld [vmem:[%s1701 + $0x1c] sm:$0xf]
          %s1710 = scalar_lea.vmem %s16, %s725
          %v1711 = vld [vmem:[%s1710] sm:$0x1]
          %v1713 = vlaneseq
          %v1714 = vshrl.u32 %v1713, 7
          %v1715 = vsub.s32 0, %v1714
          %v1716 = vrot.slane %v1711, %v1715
          %v1726 = vunpack.c.l.b16 %v1702
          %v1727 = vunpack.c.l.b16 %v1703
          %v1728 = vunpack.c.l.b16 %v1704
          %v1729 = vunpack.c.l.b16 %v1705
          %v1730 = vunpack.c.l.b16 %v1706
          %v1731 = vunpack.c.l.b16 %v1707
          %v1732 = vunpack.c.l.b16 %v1708
          %v1733 = vunpack.c.l.b16 %v1709
          %v1734 = vpack.c.b16 %v1727, %v1726
          %v1735 = vpack.c.b16 %v1729, %v1728
          %v1736 = vpack.c.b16 %v1731, %v1730
          %v1737 = vpack.c.b16 %v1733, %v1732
          %v1743 = vsel %vm649, %v1698, 0
          %1745 = vmatprep.subr.bf16.mxu0 0
          %1746 = vmatpush1.bf16.msra.mxu0 %v1734
          %1747 = vmatprep.subr.bf16.mxu0 0
          %1748 = vmatpush1.bf16.msra.mxu0 %v1735
          %1749 = vmatprep.subr.bf16.mxu0 0
          %1750 = vmatpush1.bf16.msra.mxu0 %v1736
          %1751 = vmatprep.subr.bf16.mxu0 0
          %1752 = vmatpush1.bf16.msra.mxu0 %v1737
          %1753 = vmatprep.subr.bf16.mxu0 0
          %1754 = vmatpush1.bf16.msra.mxu0 0
          %1755 = vmatprep.subr.bf16.mxu0 0
          %1756 = vmatpush1.bf16.msra.mxu0 0
          %1757 = vmatprep.subr.bf16.mxu0 0
          %1758 = vmatpush1.bf16.msra.mxu0 0
          %1759 = vmatprep.subr.bf16.mxu0 0
          %1760 = vmatpush1.bf16.msra.mxu0 0
          %1761 = vmatprep.subr.bf16.mxu0 0
          %1762 = vmatpush1.bf16.msra.mxu0 0
          %1763 = vmatprep.subr.bf16.mxu0 0
          %1764 = vmatpush1.bf16.msra.mxu0 0
          %1765 = vmatprep.subr.bf16.mxu0 0
          %1766 = vmatpush1.bf16.msra.mxu0 0
          %1767 = vmatprep.subr.bf16.mxu0 0
          %1768 = vmatpush1.bf16.msra.mxu0 0
          %1769 = vmatprep.subr.bf16.mxu0 0
          %1770 = vmatpush1.bf16.msra.mxu0 0
          %1771 = vmatprep.subr.bf16.mxu0 0
          %1772 = vmatpush1.bf16.msra.mxu0 0
          %1773 = vmatprep.subr.bf16.mxu0 0
          %1774 = vmatpush1.bf16.msra.mxu0 0
          %1775 = vmatprep.subr.bf16.mxu0 0
          %1776 = vmatpush1.bf16.msra.mxu0 0
          %1777 = vmatprep.mubr.bf16.mxu0 0
          %1778 = vmatmul.mubr.bf16.gmra.mrb[0].mxu0 %v1743
          %v1779 = vpop.f32.mrb[0].mxu0
          %v1780 = vadd.f32 %v1716, %v1779
          %v1781 = vpop.f32.mrb[0].mxu0
          %v1782 = vpop.f32.mrb[0].mxu0
          %v1783 = vpop.f32.mrb[0].mxu0
          %1784 = vdwg.mxu0
          %v1785 = vadd.f32 %v1588, %v1780
        $region93: #{tpu_custom_call.1} parent=87 // loop_footer
          %s729 = sadd.s32 1, %s725
        $region94: #{tpu_custom_call.1} parent=87 // loop_footer_branch
          %724 = sbr.rel target = $region90
        $region95: #{tpu_custom_call.1} parent=87 // loop_exit
          _
        %vm1786 = vcmask 258049
        %1787 = vst.msk [vmem:[%s541 - $0x1] sm:$0x1e] %vm1786, %v730
        %s1788 = sand.u32 %s401, 1
        %s1789 = scalar_lea.sflag [#allocation3], %s1788
        %s1790 = sand.u32 %s401, 1
        %s1791 = smul.addr %s1790, 4
        %s1792 = scalar_lea.vmem [#allocation2], %s1791
        // Predicated region
        $region96: #{tpu_custom_call.1} parent=87 // pred_check
          %p1793 = pneg %p411
        $region97: #{tpu_custom_call.1} parent=87 // pred_check_branch
          %1795 = sbr.rel (%p1793) target = $region99
        $region98: #{tpu_custom_call.1} parent=87 // pred_region
          %s1797 = ssub.s32 64, 64
          %1798 = vsyncadd %s1789, %s1797
          %s1799 = smul.addr %s31, 64
          %s1800 = scalar_lea.hbm %s17, %s1799
          %s1802 = sshll.u32 %s1792, 4
          %s1803 = int_to_ptr.vmem [resolvable:$true] %s1802
          %1805 = dma.vmem_to_hbm [thread:$0]  %s1803, 64, %s1800, %s1789
        $region99: #{tpu_custom_call.1} parent=87 // pred_fallthru
          _
      $region88: #{tpu_custom_call.1} parent=5 // pred_fallthru
        _
      %p1806 = scmp.le.s32.totalorder 2, %s26
      // Predicated region
      $region100: #{tpu_custom_call.1} parent=5 // pred_check
        %p1807 = pneg %p1806
      $region101: #{tpu_custom_call.1} parent=5 // pred_check_branch
        %1809 = sbr.rel (%p1807) target = $region103
      $region102: #{tpu_custom_call.1} parent=5 // pred_region
        %s1810 = ssub.s32 %s26, 2
        // Predicated region
        $region104: #{tpu_custom_call.1} parent=102 // pred_check
          %p1811 = pneg %p417
        $region105: #{tpu_custom_call.1} parent=102 // pred_check_branch
          %1813 = sbr.rel (%p1811) target = $region107
        $region106: #{tpu_custom_call.1} parent=102 // pred_region
          %s1814 = sand.u32 %s402, 1
          %s1815 = scalar_lea.sflag [#allocation3], %s1814
          %s1816 = sand.u32 %s402, 1
          %s1817 = smul.addr %s1816, 4
          %s1818 = scalar_lea.vmem [#allocation2], %s1817
          %1819 = dma.done %s1815, 64
        $region107: #{tpu_custom_call.1} parent=102 // pred_fallthru
          _
      $region103: #{tpu_custom_call.1} parent=5 // pred_fallthru
        _
    $region6: #{tpu_custom_call.1} parent=1 // loop_footer
      %s30 = sadd.s32 1, %s26
    $region7: #{tpu_custom_call.1} parent=1 // loop_footer_branch
      %25 = sbr.rel target = $region3
    $region8: #{tpu_custom_call.1} parent=1 // loop_exit
      _
    %1820 = vsyncpa [#allocation3], 1
    %s1821 = scalar_lea.sflag [#allocation3], 1
    %1822 = vsyncpa %s1821, 1

</llo_original>
